<compile_context>
chip_gen: v5e
topology: v5e:2x2
jax: 0.10.0
libtpu: 0.0.40
codegen_flags: <defaults>
</compile_context>

<pallas_src>
import jax
import jax.numpy as jnp
from jax import lax
from jax.experimental import pallas as pl
from jax.experimental.pallas import tpu as pltpu

LRELU_SLOPE = 0.1


def _round_up(v, m):
    return -(-v // m) * m


# ----------------------------------------------------------------------------
# Pallas Conv1d kernel (optionally fused LeakyReLU), rows packed along lanes
#   out[co, r*SEG + j] = b[co] + sum_{ci,k} W[co,ci,k] * xpad[r, ci, j*S + k]
# ----------------------------------------------------------------------------
def _make_conv_kernel(*, K, stride, G, g, mode, slope, has_halo):
    def kernel(*refs):
        if has_halo:
            x0_ref, x1_ref, w_ref, b_ref, o_ref = refs
        else:
            x0_ref, w_ref, b_ref, o_ref = refs
            x1_ref = None

        def tap(k):
            # k >= K only occurs for the zero-padded tail of the last tap
            # group; its weights are zero so return zeros (no shift needed).
            if k >= K:
                return jnp.zeros((x0_ref.shape[1], o_ref.shape[-1]),
                                 x0_ref.dtype)
            ph, off = k % stride, k // stride
            base = x0_ref[ph]                              # (Cin, Tt) bf16
            if off == 0:
                return base
            if x1_ref is None:
                # Single time tile: every valid output's taps live inside this
                # tile; the overhang columns are never used, so zero-extend
                # instead of DMA'ing an all-zero halo block.
                tail = jnp.zeros((base.shape[0], off), base.dtype)
            else:
                tail = x1_ref[ph, :, :off]                 # halo columns
            # static (XLU) realignment: stitch the halo/zeros onto the tile
            return jnp.concatenate([base[:, off:], tail], axis=-1)

        acc = jnp.zeros(o_ref.shape, jnp.float32)
        if mode == "mul":
            # Cin == 1: degenerate contraction, VPU broadcast multiply-add
            for k in range(K):
                acc = acc + (w_ref[:, k:k + 1].astype(jnp.float32)
                             * tap(k).astype(jnp.float32))
        else:
            # grouped im2col: each group is one MXU dot of contraction g*Cin
            for gi in range(G):
                if g == 1:
                    rhs = tap(gi)
                else:
                    rhs = jnp.concatenate([tap(gi * g + t) for t in range(g)],
                                          axis=0)          # (g*Cin, Tt)
                acc = acc + jnp.dot(w_ref[gi], rhs,
                                    preferred_element_type=jnp.float32)

        acc = acc + b_ref[...]
        if slope is not None:
            acc = jnp.where(acc > 0, acc, slope * acc)      # fused LeakyReLU
        o_ref[...] = acc.astype(o_ref.dtype)

    return kernel


def pallas_conv1d(x, W, b, *, stride, padding, lrelu_slope=None):
    """PyTorch-semantics Conv1d (+ optional fused LeakyReLU) via Pallas.

    All batch rows are packed along the lane axis as segments of SEG
    phase-decomposed columns, so small-Lout layers fill their lane tiles.
    Inputs/weights are cast to bf16; accumulation / bias / LeakyReLU are f32.
    """
    B, Cin, L = x.shape
    Cout, Cin_w, K = W.shape
    assert Cin_w == Cin
    S = stride
    Lout = (L + 2 * padding - K) // S + 1
    assert Lout > 0
    halo = (K - 1) // S
    assert halo < 128, "tap halo must fit in one 128-lane block"

    # Per-row segment length (phase-decomposed columns).  Valid outputs of a
    # row only read columns [0, Lout-1 + halo] of that row's own segment, so
    # rows never contaminate each other.
    SEG = max(Lout + halo, -(-(padding + L) // S))

    # --- out-channel tile: 256 fills the 256-wide v6e/v7x MXU (2 passes v5e).
    # TODO(synk): benchmark tco=128 for the 1024-channel layers on v5e.
    if Cout % 256 == 0:
        tco = 256
    elif Cout % 128 == 0:
        tco = 128
    else:
        tco = Cout                                   # 32 or 1 (full dim)
    CT = Cout // tco

    # --- lane tile: multiple of 128 (unmasked stores); keep the f32
    # accumulator <= 128 KiB (<= 32 vregs) so it never spills.
    total = B * SEG
    acc_cap = max(128, (32768 // tco) // 128 * 128)
    Tt = min(512, acc_cap, _round_up(total, 128))
    TT = -(-total // Tt)
    Ltot = TT * Tt
    has_halo = TT > 1
    in_lanes = Ltot + (128 if has_halo else 0)

    # --- zero-pad each row, phase-decompose, pack rows along lanes, cast bf16.
    # TODO(synk): stride-1 consumers could take this padded layout directly
    # from the producing kernel and skip one HBM round trip.
    right = SEG * S - padding - L
    assert right >= 0
    xp = jnp.pad(x, ((0, 0), (0, 0), (padding, right)))
    xr = (xp.reshape(B, Cin, SEG, S)
            .transpose(3, 1, 0, 2)                  # (S, Cin, B, SEG)
            .reshape(S, Cin, B * SEG))
    xr = jnp.pad(xr, ((0, 0), (0, 0), (0, in_lanes - B * SEG)))
    xr = xr.astype(jnp.bfloat16)

    # --- weight layout / kernel mode ---
    if Cin == 1:
        mode, G, g = "mul", 0, 0
        wr = W.reshape(Cout, K).astype(jnp.bfloat16)
        w_spec = pl.BlockSpec((tco, K), lambda c, t: (c, 0))
        w_bytes = tco * 128 * 2
    else:
        mode = "dot"
        # group taps so each MXU dot has contraction ~256 (MXU depth on
        # v6e/v7x); Cin>=512 layers contract per tap (already deep enough).
        g = min(K, max(1, 256 // Cin)) if Cin <= 256 else 1
        G = -(-K // g)
        Wt = jnp.transpose(W, (2, 0, 1))                      # (K, Cout, Cin)
        if G * g > K:
            Wt = jnp.pad(Wt, ((0, G * g - K), (0, 0), (0, 0)))
        wr = (Wt.reshape(G, g, Cout, Cin)
                .transpose(0, 2, 1, 3)
                .reshape(G, Cout, g * Cin)
                .astype(jnp.bfloat16))
        w_spec = pl.BlockSpec((G, tco, g * Cin), lambda c, t: (0, c, 0))
        w_bytes = G * tco * g * Cin * 2
    br = b.reshape(Cout, 1).astype(jnp.float32)

    in_specs = [pl.BlockSpec((S, Cin, Tt), lambda c, t: (0, 0, t))]
    args = [xr]
    if has_halo:
        r = Tt // 128
        in_specs.append(
            pl.BlockSpec((S, Cin, 128), lambda c, t: (0, 0, t * r + r)))
        args.append(xr)
    in_specs += [w_spec, pl.BlockSpec((tco, 1), lambda c, t: (c, 0))]
    args += [wr, br]

    kernel = _make_conv_kernel(K=K, stride=S, G=G, g=g, mode=mode,
                               slope=lrelu_slope, has_halo=has_halo)

    # Blocks are small; keep the scoped VMEM limit well under v7x's 64 MiB.
    blk = (S * Cin * Tt * 2 + (S * Cin * 128 * 2 if has_halo else 0)
           + w_bytes + tco * 128 * 4 + tco * Tt * 4)
    vmem_limit = min(max(3 * blk + (8 << 20), 24 << 20), 40 << 20)

    out = pl.pallas_call(
        kernel,
        out_shape=jax.ShapeDtypeStruct((Cout, Ltot), x.dtype),
        grid_spec=pltpu.PrefetchScalarGridSpec(
            num_scalar_prefetch=0,
            # weights (largest operand on the deep layers) are on the outer
            # axis so each tile is DMA'd once; the packed activation streams.
            grid=(CT, TT),
            in_specs=in_specs,
            out_specs=pl.BlockSpec((tco, Tt), lambda c, t: (c, t)),
        ),
        compiler_params=pltpu.CompilerParams(
            dimension_semantics=("parallel", "parallel"),
            vmem_limit_bytes=vmem_limit),
    )(*args)

    # unpack rows: (Cout, Ltot) -> (B, Cout, Lout); garbage separator columns
    # (which hold lrelu(bias) / cross-row reads) are dropped here.
    out = out[:, :B * SEG].reshape(Cout, B, SEG)[:, :, :Lout]
    return out.transpose(1, 0, 2)


# ----------------------------------------------------------------------------
# PeriodDiscriminator / MPD built on the Pallas conv
# ----------------------------------------------------------------------------
_PD_SPECS = [
    # (Cin, Cout, K, stride, padding)
    (1,    32,   5, 3, 2),
    (32,   128,  5, 3, 2),
    (128,  512,  5, 3, 2),
    (512,  1024, 5, 3, 2),
    (1024, 1024, 5, 1, 2),
    (1024, 1,    3, 1, 1),     # final_conv
]


def init_period_disc(key):
    # weight_norm only re-parametrizes the stored weight; the forward uses the
    # effective Conv2d weight, initialized directly here (kernel width dim = 1).
    params = []
    keys = jax.random.split(key, 2 * len(_PD_SPECS))
    for i, (cin, cout, k, s, p) in enumerate(_PD_SPECS):
        scale = 1.0 / float(cin * k) ** 0.5
        W = scale * jax.random.normal(keys[2 * i], (cout, cin, k), jnp.float32)
        b = 0.01 * jax.random.normal(keys[2 * i + 1], (cout,), jnp.float32)
        params.append((W, b, s, p))
    return params


def init_mpd(key, periods):
    return [init_period_disc(k) for k in jax.random.split(key, len(periods))]


def period_discriminator_forward(params, x, period, slope):
    """x: (B, 1, t) -> (flattened score (B, -1), list of layer activations)."""
    B, C, t = x.shape
    if t % period != 0:
        n_pad = period - t % period
        x = jnp.pad(x, ((0, 0), (0, 0), (0, n_pad)), mode="reflect")
        t = t + n_pad
    T = t // period
    # (B, C, T, P) -> (B*P, C, T): the (K,1) conv never mixes the period axis,
    # so it folds into the row axis that the Pallas conv packs along lanes.
    out = (x.reshape(B, C, T, period)
             .transpose(0, 3, 1, 2)
             .reshape(B * period, C, T))
    layers = []
    n_layers = len(params)
    # TODO(synk): fuse the 1-channel final conv into layer 5's epilogue to
    # skip one re-read of the 1024-channel activation.
    for i, (W, b, s, p) in enumerate(params):
        last = i == n_layers - 1
        out = pallas_conv1d(out, W, b, stride=s, padding=p,
                            lrelu_slope=None if last else slope)
        Cout, Tout = out.shape[1], out.shape[2]
        # back to the PyTorch (B, Cout, Tout, P) layout for the returned list
        layers.append(out.reshape(B, period, Cout, Tout).transpose(0, 2, 3, 1))
    y = layers[-1]                                   # (B, 1, Tf, P)
    return y.reshape(B, -1), layers


def mpd_forward(mpd_params, periods, y_true, y_pred, slope=LRELU_SLOPE):
    B = y_true.shape[0]
    # true/pred share weights -> batch them through each discriminator once
    x = jnp.concatenate([y_true, y_pred], axis=0)
    y_ds_true, y_ds_pred = [], []
    layer_true = layer_pred = None
    for disc_params, period in zip(mpd_params, periods):
        y_d, layers = period_discriminator_forward(disc_params, x, period, slope)
        y_ds_true.append(y_d[:B])
        y_ds_pred.append(y_d[B:])
        # matches the PyTorch module: only the LAST period's layer lists survive
        layer_true = [l[:B] for l in layers]
        layer_pred = [l[B:] for l in layers]
    return y_ds_true, y_ds_pred, layer_true, layer_pred


# ----------------------------------------------------------------------------
# pure-JAX reference (sanity check only) — matches the kernel's numerics:
# bf16 matmul operands, f32 accumulation / bias / LeakyReLU.
# ----------------------------------------------------------------------------
def _ref_period_disc(params, x, period, slope):
    B, C, t = x.shape
    if t % period != 0:
        n_pad = period - t % period
        x = jnp.pad(x, ((0, 0), (0, 0), (0, n_pad)), mode="reflect")
    T = x.shape[-1] // period
    out = x.reshape(B, C, T, period)
    layers = []
    n = len(params)
    for i, (W, b, s, p) in enumerate(params):
        out = lax.conv_general_dilated(
            out.astype(jnp.bfloat16), W[:, :, :, None].astype(jnp.bfloat16),
            window_strides=(s, 1), padding=[(p, p), (0, 0)],
            dimension_numbers=("NCHW", "OIHW", "NCHW"),
            preferred_element_type=jnp.float32)
        out = out + b[None, :, None, None]
        if i != n - 1:
            out = jnp.where(out > 0, out, slope * out)
        layers.append(out)
    return out.reshape(B, -1), layers


if __name__ == "__main__":
    key = jax.random.PRNGKey(0)
    periods = (2, 3)               # MPD(periods=[2, 3], l_relu_slope=0.1)
    B, t = 2, 2048
    kp, kt, kq = jax.random.split(key, 3)
    mpd_params = init_mpd(kp, periods)
    y_true = jax.random.normal(kt, (B, 1, t), jnp.float32)
    y_pred = jax.random.normal(kq, (B, 1, t), jnp.float32)

    y_ds_true, y_ds_pred, layer_true, layer_pred = mpd_forward(
        mpd_params, periods, y_true, y_pred, slope=LRELU_SLOPE)
    jax.block_until_ready((y_ds_true, y_ds_pred, layer_true, layer_pred))

    # --- sanity check vs a pure-JAX (lax.conv, bf16-matmul) reference ---
    def _close(ref, got, what):
        assert ref.shape == got.shape, (what, ref.shape, got.shape)
        err = float(jnp.max(jnp.abs(ref - got)))
        tol = 2e-2 * max(1.0, float(jnp.max(jnp.abs(ref))))
        assert err <= tol, f"{what}: max abs err {err} > {tol}"

    for i, (dp, period) in enumerate(zip(mpd_params, periods)):
        rt, lt = _ref_period_disc(dp, y_true, period, LRELU_SLOPE)
        rp, lp = _ref_period_disc(dp, y_pred, period, LRELU_SLOPE)
        _close(rt, y_ds_true[i], f"period {period} y_true score")
        _close(rp, y_ds_pred[i], f"period {period} y_pred score")
        if i == len(periods) - 1:          # module returns the last period's layers
            for j, (a, g) in enumerate(zip(lt, layer_true)):
                _close(a, g, f"layer_true[{j}]")
            for j, (a, g) in enumerate(zip(lp, layer_pred)):
                _close(a, g, f"layer_pred[{j}]")

    print("KERNEL_OK")
</pallas_src>

<mosaic_0001>
module attributes {stable_mosaic.version = 11 : i64} {
  func.func @kernel(%arg0: i32, %arg1: i32, %arg2: memref<3x1x512xbf16, #tpu.memory_space<vmem>>, %arg3: memref<3x1x128xbf16, #tpu.memory_space<vmem>>, %arg4: memref<32x5xbf16, #tpu.memory_space<vmem>>, %arg5: memref<32x1xf32, #tpu.memory_space<vmem>>, %arg6: memref<32x512xf32, #tpu.memory_space<vmem>>) attributes {dimension_semantics = [#tpu.dimension_semantics<parallel>, #tpu.dimension_semantics<parallel>], iteration_bounds = array<i64: 1, 6>, scalar_prefetch = 0 : i64, scratch_operands = 0 : i64, tpu.core_type = #tpu.core_type<tc>, window_params = [{transform_indices = @transform_0, window_bounds = array<i64: 3, 1, 512>}, {transform_indices = @transform_1, window_bounds = array<i64: 3, 1, 128>}, {transform_indices = @transform_2, window_bounds = array<i64: 32, 5>}, {transform_indices = @transform_3, window_bounds = array<i64: 32, 1>}, {transform_indices = @transform_4, window_bounds = array<i64: 32, 512>}]} {
    %cst = arith.constant 0.000000e+00 : f32
    %0 = vector.broadcast %cst : f32 to vector<32x512xf32>
    %c0 = arith.constant 0 : index
    %c0_0 = arith.constant 0 : index
    %1 = vector.load %arg4[%c0, %c0_0] : memref<32x5xbf16, #tpu.memory_space<vmem>>, vector<32x1xbf16>
    %2 = arith.extf %1 : vector<32x1xbf16> to vector<32x1xf32>
    %c0_1 = arith.constant 0 : index
    %c0_2 = arith.constant 0 : index
    %c0_3 = arith.constant 0 : index
    %3 = vector.load %arg2[%c0_1, %c0_2, %c0_3] : memref<3x1x512xbf16, #tpu.memory_space<vmem>>, vector<1x1x512xbf16>
    %4 = vector.shape_cast %3 : vector<1x1x512xbf16> to vector<1x512xbf16>
    %5 = arith.extf %4 : vector<1x512xbf16> to vector<1x512xf32>
    %6 = vector.broadcast %2 : vector<32x1xf32> to vector<32x512xf32>
    %7 = vector.broadcast %5 : vector<1x512xf32> to vector<32x512xf32>
    %8 = arith.mulf %6, %7 : vector<32x512xf32>
    %9 = arith.addf %0, %8 : vector<32x512xf32>
    %c0_4 = arith.constant 0 : index
    %c1 = arith.constant 1 : index
    %10 = vector.load %arg4[%c0_4, %c1] : memref<32x5xbf16, #tpu.memory_space<vmem>>, vector<32x1xbf16>
    %11 = arith.extf %10 : vector<32x1xbf16> to vector<32x1xf32>
    %c1_5 = arith.constant 1 : index
    %c0_6 = arith.constant 0 : index
    %c0_7 = arith.constant 0 : index
    %12 = vector.load %arg2[%c1_5, %c0_6, %c0_7] : memref<3x1x512xbf16, #tpu.memory_space<vmem>>, vector<1x1x512xbf16>
    %13 = vector.shape_cast %12 : vector<1x1x512xbf16> to vector<1x512xbf16>
    %14 = arith.extf %13 : vector<1x512xbf16> to vector<1x512xf32>
    %15 = vector.broadcast %11 : vector<32x1xf32> to vector<32x512xf32>
    %16 = vector.broadcast %14 : vector<1x512xf32> to vector<32x512xf32>
    %17 = arith.mulf %15, %16 : vector<32x512xf32>
    %18 = arith.addf %9, %17 : vector<32x512xf32>
    %c0_8 = arith.constant 0 : index
    %c2 = arith.constant 2 : index
    %19 = vector.load %arg4[%c0_8, %c2] : memref<32x5xbf16, #tpu.memory_space<vmem>>, vector<32x1xbf16>
    %20 = arith.extf %19 : vector<32x1xbf16> to vector<32x1xf32>
    %c2_9 = arith.constant 2 : index
    %c0_10 = arith.constant 0 : index
    %c0_11 = arith.constant 0 : index
    %21 = vector.load %arg2[%c2_9, %c0_10, %c0_11] : memref<3x1x512xbf16, #tpu.memory_space<vmem>>, vector<1x1x512xbf16>
    %22 = vector.shape_cast %21 : vector<1x1x512xbf16> to vector<1x512xbf16>
    %23 = arith.extf %22 : vector<1x512xbf16> to vector<1x512xf32>
    %24 = vector.broadcast %20 : vector<32x1xf32> to vector<32x512xf32>
    %25 = vector.broadcast %23 : vector<1x512xf32> to vector<32x512xf32>
    %26 = arith.mulf %24, %25 : vector<32x512xf32>
    %27 = arith.addf %18, %26 : vector<32x512xf32>
    %c0_12 = arith.constant 0 : index
    %c3 = arith.constant 3 : index
    %28 = vector.load %arg4[%c0_12, %c3] : memref<32x5xbf16, #tpu.memory_space<vmem>>, vector<32x1xbf16>
    %29 = arith.extf %28 : vector<32x1xbf16> to vector<32x1xf32>
    %c0_13 = arith.constant 0 : index
    %c0_14 = arith.constant 0 : index
    %c0_15 = arith.constant 0 : index
    %30 = vector.load %arg2[%c0_13, %c0_14, %c0_15] : memref<3x1x512xbf16, #tpu.memory_space<vmem>>, vector<1x1x512xbf16>
    %31 = vector.shape_cast %30 : vector<1x1x512xbf16> to vector<1x512xbf16>
    %c0_16 = arith.constant 0 : index
    %c0_17 = arith.constant 0 : index
    %c0_18 = arith.constant 0 : index
    %32 = vector.load %arg3[%c0_16, %c0_17, %c0_18] : memref<3x1x128xbf16, #tpu.memory_space<vmem>>, vector<1x1x1xbf16>
    %33 = vector.shape_cast %32 : vector<1x1x1xbf16> to vector<1x1xbf16>
    %34 = vector.extract_strided_slice %31 {offsets = [0, 1], sizes = [1, 511], strides = [1, 1]} : vector<1x512xbf16> to vector<1x511xbf16>
    %35 = tpu.concatenate %34, %33 in 1 : vector<1x511xbf16>, vector<1x1xbf16> -> vector<1x512xbf16>
    %36 = arith.extf %35 : vector<1x512xbf16> to vector<1x512xf32>
    %37 = vector.broadcast %29 : vector<32x1xf32> to vector<32x512xf32>
    %38 = vector.broadcast %36 : vector<1x512xf32> to vector<32x512xf32>
    %39 = arith.mulf %37, %38 : vector<32x512xf32>
    %40 = arith.addf %27, %39 : vector<32x512xf32>
    %c0_19 = arith.constant 0 : index
    %c4 = arith.constant 4 : index
    %41 = vector.load %arg4[%c0_19, %c4] : memref<32x5xbf16, #tpu.memory_space<vmem>>, vector<32x1xbf16>
    %42 = arith.extf %41 : vector<32x1xbf16> to vector<32x1xf32>
    %c1_20 = arith.constant 1 : index
    %c0_21 = arith.constant 0 : index
    %c0_22 = arith.constant 0 : index
    %43 = vector.load %arg2[%c1_20, %c0_21, %c0_22] : memref<3x1x512xbf16, #tpu.memory_space<vmem>>, vector<1x1x512xbf16>
    %44 = vector.shape_cast %43 : vector<1x1x512xbf16> to vector<1x512xbf16>
    %c1_23 = arith.constant 1 : index
    %c0_24 = arith.constant 0 : index
    %c0_25 = arith.constant 0 : index
    %45 = vector.load %arg3[%c1_23, %c0_24, %c0_25] : memref<3x1x128xbf16, #tpu.memory_space<vmem>>, vector<1x1x1xbf16>
    %46 = vector.shape_cast %45 : vector<1x1x1xbf16> to vector<1x1xbf16>
    %47 = vector.extract_strided_slice %44 {offsets = [0, 1], sizes = [1, 511], strides = [1, 1]} : vector<1x512xbf16> to vector<1x511xbf16>
    %48 = tpu.concatenate %47, %46 in 1 : vector<1x511xbf16>, vector<1x1xbf16> -> vector<1x512xbf16>
    %49 = arith.extf %48 : vector<1x512xbf16> to vector<1x512xf32>
    %50 = vector.broadcast %42 : vector<32x1xf32> to vector<32x512xf32>
    %51 = vector.broadcast %49 : vector<1x512xf32> to vector<32x512xf32>
    %52 = arith.mulf %50, %51 : vector<32x512xf32>
    %53 = arith.addf %40, %52 : vector<32x512xf32>
    %c0_26 = arith.constant 0 : index
    %c0_27 = arith.constant 0 : index
    %54 = vector.load %arg5[%c0_26, %c0_27] : memref<32x1xf32, #tpu.memory_space<vmem>>, vector<32x1xf32>
    %55 = vector.broadcast %54 : vector<32x1xf32> to vector<32x512xf32>
    %56 = arith.addf %53, %55 : vector<32x512xf32>
    %cst_28 = arith.constant 0.000000e+00 : f32
    %57 = vector.broadcast %cst_28 : f32 to vector<32x512xf32>
    %58 = arith.cmpf ogt, %56, %57 : vector<32x512xf32>
    %cst_29 = arith.constant 1.000000e-01 : f32
    %59 = vector.broadcast %cst_29 : f32 to vector<32x512xf32>
    %60 = arith.mulf %59, %56 : vector<32x512xf32>
    %61 = arith.select %58, %56, %60 : vector<32x512xi1>, vector<32x512xf32>
    %c0_30 = arith.constant 0 : index
    %c0_31 = arith.constant 0 : index
    %62 = vector.load %arg6[%c0_30, %c0_31] : memref<32x512xf32, #tpu.memory_space<vmem>>, vector<32x512xf32>
    tpu.vector_store %arg6[%c0_30, %c0_31], %61 {strides = array<i32>} : memref<32x512xf32, #tpu.memory_space<vmem>>, vector<32x512xf32>,
    return
  }
  func.func @transform_0(%arg0: i32, %arg1: i32) -> (i32, i32, i32) {
    %c0_i32 = arith.constant 0 : i32
    %c0_i32_0 = arith.constant 0 : i32
    %c0_i32_1 = arith.constant 0 : i32
    return %c0_i32, %c0_i32_0, %arg1 : i32, i32, i32
  }
  func.func @transform_1(%arg0: i32, %arg1: i32) -> (i32, i32, i32) {
    %c4_i32 = arith.constant 4 : i32
    %0 = arith.muli %arg1, %c4_i32 : i32
    %c4_i32_0 = arith.constant 4 : i32
    %1 = arith.addi %0, %c4_i32_0 : i32
    %c0_i32 = arith.constant 0 : i32
    %c0_i32_1 = arith.constant 0 : i32
    %c0_i32_2 = arith.constant 0 : i32
    return %c0_i32, %c0_i32_1, %1 : i32, i32, i32
  }
  func.func @transform_2(%arg0: i32, %arg1: i32) -> (i32, i32) {
    %c0_i32 = arith.constant 0 : i32
    %c0_i32_0 = arith.constant 0 : i32
    return %arg0, %c0_i32 : i32, i32
  }
  func.func @transform_3(%arg0: i32, %arg1: i32) -> (i32, i32) {
    %c0_i32 = arith.constant 0 : i32
    %c0_i32_0 = arith.constant 0 : i32
    return %arg0, %c0_i32 : i32, i32
  }
  func.func @transform_4(%arg0: i32, %arg1: i32) -> (i32, i32) {
    %c0_i32 = arith.constant 0 : i32
    return %arg0, %arg1 : i32, i32
  }
}

</mosaic_0001>

<llo_original>
// kernel: tpu_custom_call.1
$region0: #{tpu_custom_call.1}
  #allocation0 [shape = 'u32[]', space=smem, size = 0x4, offset = 0x4, fixed_abs, tag = 'smem constant byte address 0x4 - core index']
  #allocation1 [shape = 'u32[72,128]{1,0:T(1,128)}', space=vmem, size = 0x9000, scoped, tag = 'internal scratch']
  %s0 = inlined_call_operand.vmem [shape: bf16[3,1,3200], index: 0, kind: input, shape index: {}]
  %s1 = inlined_call_operand.vmem [shape: bf16[3,1,3200], index: 1, kind: input, shape index: {}]
  %s2 = inlined_call_operand.vmem [shape: bf16[32,5], index: 2, kind: input, shape index: {}]
  %s3 = inlined_call_operand.vmem [shape: f32[32,1], index: 3, kind: input, shape index: {}]
  %s4 = inlined_call_operand.hbm [shape: f32[32,3072], index: 4, kind: output, shape index: {}]
  %s5 = sld [smem:[#allocation0]]
  $region149: #{tpu_custom_call.1} parent=0
    _
  %s7 = ssub.s32 1, %s5
  %s8 = scalar_select 0, %s7, %s5
  $region1: #{tpu_custom_call.1} parent=0
    #allocation2 [shape = 'u8[12288]{0}', space=vmem, size = 0x3000, scoped, tag = 'input window, operand 0']
    #allocation3 [shape = 'u8[3072]{0}', space=vmem, size = 0xc00, scoped, tag = 'input window, operand 1']
    #allocation4 [shape = 'u8[131072]{0}', space=vmem, size = 0x20000, scoped, tag = 'output window, operand 0']
    #allocation5 [shape = 's32[2]{0}', space=sflag, size = 0x8, scoped, tag = 'scoped memory for tpu_custom_call.1']
    %9 = vsyncpa [#allocation5], 0
    %s10 = scalar_lea.sflag [#allocation5], 1
    %11 = vsyncpa %s10, 0
    loop: start=0, step=1, limit=8
    $region2: #{tpu_custom_call.1} parent=1 // loop_pre_header
      _
    $region3: #{tpu_custom_call.1} parent=1 // loop_header
      %s13 = sphi 0, %s17
      %p14 = scmp.ge.s32.totalorder %s13, 8
      %s20 = sphi 0, %s32
      %s21 = sphi 0, %s28
      %s22 = sphi 0, %s20
      %s23 = sphi 0, %s21
      %s24 = sphi 0, %s22
      %s25 = sphi 0, %s23
      %s35 = sphi 0, %s37
      %s38 = sphi 0, %s35
      %s39 = sphi 0, %s38
      %s55 = sphi 0, %s39
      %s65 = sphi 0, %s67
      %s68 = sphi 0, %s65
      %s69 = sphi 0, %s68
      %s85 = sphi 0, %s69
      %s91 = sphi 0, %s93
      %s94 = sphi 0, %s91
      %s95 = sphi 0, %s94
      %s111 = sphi 0, %s95
      %s117 = sphi 0, %s119
      %s120 = sphi 0, %s117
      %s121 = sphi 0, %s120
      %s137 = sphi 0, %s121
      %s145 = sphi 0, %s147
      %s148 = sphi 0, %s145
      %s149 = sphi 0, %s148
      %s165 = sphi 0, %s149
    $region4: #{tpu_custom_call.1} parent=1 // loop_header_branch
      %16 = sbr.rel (%p14) target = $region8
    $region5: #{tpu_custom_call.1} parent=1 // loop_body
      %s18 = ssub.s32 %s13, 1
      %s19 = ssub.s32 %s13, 2
      %s26 = sadd.s32 1, %s21
      %p27 = scmp.ge.s32.totalorder %s26, 6
      %s28 = scalar_select %p27, 0, %s26
      %s29 = sadd.s32 1, %s20
      %s30 = scalar_select %p27, %s29, %s20
      %p31 = scmp.ge.s32.totalorder %s30, 1
      %s32 = scalar_select %p31, 0, %s30
      %s33 = ssub.s32 %s21, %s28
      %p34 = scmp.eq.s32.totalorder %s33, 0
      %s36 = sadd.s32 %s35, 1
      %s37 = scalar_select %p34, %s35, %s36
      %p40 = pneg %p34
      %p41 = scmp.eq.s32.totalorder %s13, 5
      %p42 = por %p40, %p41
      %p43 = scmp.ne.s32.totalorder %s35, %s38
      %p44 = scmp.eq.s32.totalorder %s13, 0
      %p45 = por %p43, %p44
      %p46 = scmp.ne.s32.totalorder %s35, %s38
      %p47 = scmp.eq.s32.totalorder %s18, 5
      %p48 = por %p46, %p47
      %p49 = scmp.ne.s32.totalorder %s38, %s39
      %p50 = scmp.eq.s32.totalorder %s18, 0
      %p51 = por %p49, %p50
      %p52 = scmp.ne.s32.totalorder %s38, %s39
      %p53 = scmp.eq.s32.totalorder %s19, 5
      %p54 = por %p52, %p53
      %p56 = scmp.ne.s32.totalorder %s39, %s55
      %p57 = scmp.eq.s32.totalorder %s19, 0
      %p58 = por %p56, %p57
      %s59 = smul.u32 %s21, 4
      %s60 = sadd.s32 %s59, 4
      %s61 = smul.u32 %s28, 4
      %s62 = sadd.s32 %s61, 4
      %s63 = ssub.s32 %s60, %s62
      %p64 = scmp.eq.s32.totalorder %s63, 0
      %s66 = sadd.s32 %s65, 1
      %s67 = scalar_select %p64, %s65, %s66
      %p70 = pneg %p64
      %p71 = scmp.eq.s32.totalorder %s13, 5
      %p72 = por %p70, %p71
      %p73 = scmp.ne.s32.totalorder %s65, %s68
      %p74 = scmp.eq.s32.totalorder %s13, 0
      %p75 = por %p73, %p74
      %p76 = scmp.ne.s32.totalorder %s65, %s68
      %p77 = scmp.eq.s32.totalorder %s18, 5
      %p78 = por %p76, %p77
      %p79 = scmp.ne.s32.totalorder %s68, %s69
      %p80 = scmp.eq.s32.totalorder %s18, 0
      %p81 = por %p79, %p80
      %p82 = scmp.ne.s32.totalorder %s68, %s69
      %p83 = scmp.eq.s32.totalorder %s19, 5
      %p84 = por %p82, %p83
      %p86 = scmp.ne.s32.totalorder %s69, %s85
      %p87 = scmp.eq.s32.totalorder %s19, 0
      %p88 = por %p86, %p87
      %s89 = ssub.s32 %s20, %s32
      %p90 = scmp.eq.s32.totalorder %s89, 0
      %s92 = sadd.s32 %s91, 1
      %s93 = scalar_select %p90, %s91, %s92
      %p96 = pneg %p90
      %p97 = scmp.eq.s32.totalorder %s13, 5
      %p98 = por %p96, %p97
      %p99 = scmp.ne.s32.totalorder %s91, %s94
      %p100 = scmp.eq.s32.totalorder %s13, 0
      %p101 = por %p99, %p100
      %p102 = scmp.ne.s32.totalorder %s91, %s94
      %p103 = scmp.eq.s32.totalorder %s18, 5
      %p104 = por %p102, %p103
      %p105 = scmp.ne.s32.totalorder %s94, %s95
      %p106 = scmp.eq.s32.totalorder %s18, 0
      %p107 = por %p105, %p106
      %p108 = scmp.ne.s32.totalorder %s94, %s95
      %p109 = scmp.eq.s32.totalorder %s19, 5
      %p110 = por %p108, %p109
      %p112 = scmp.ne.s32.totalorder %s95, %s111
      %p113 = scmp.eq.s32.totalorder %s19, 0
      %p114 = por %p112, %p113
      %s115 = ssub.s32 %s20, %s32
      %p116 = scmp.eq.s32.totalorder %s115, 0
      %s118 = sadd.s32 %s117, 1
      %s119 = scalar_select %p116, %s117, %s118
      %p122 = pneg %p116
      %p123 = scmp.eq.s32.totalorder %s13, 5
      %p124 = por %p122, %p123
      %p125 = scmp.ne.s32.totalorder %s117, %s120
      %p126 = scmp.eq.s32.totalorder %s13, 0
      %p127 = por %p125, %p126
      %p128 = scmp.ne.s32.totalorder %s117, %s120
      %p129 = scmp.eq.s32.totalorder %s18, 5
      %p130 = por %p128, %p129
      %p131 = scmp.ne.s32.totalorder %s120, %s121
      %p132 = scmp.eq.s32.totalorder %s18, 0
      %p133 = por %p131, %p132
      %p134 = scmp.ne.s32.totalorder %s120, %s121
      %p135 = scmp.eq.s32.totalorder %s19, 5
      %p136 = por %p134, %p135
      %p138 = scmp.ne.s32.totalorder %s121, %s137
      %p139 = scmp.eq.s32.totalorder %s19, 0
      %p140 = por %p138, %p139
      %s141 = ssub.s32 %s20, %s32
      %s142 = ssub.s32 %s21, %s28
      %s143 = sor.u32 %s141, %s142
      %p144 = scmp.eq.s32.totalorder %s143, 0
      %s146 = sadd.s32 %s145, 1
      %s147 = scalar_select %p144, %s145, %s146
      %p150 = pneg %p144
      %p151 = scmp.eq.s32.totalorder %s13, 5
      %p152 = por %p150, %p151
      %p153 = scmp.ne.s32.totalorder %s145, %s148
      %p154 = scmp.eq.s32.totalorder %s13, 0
      %p155 = por %p153, %p154
      %p156 = scmp.ne.s32.totalorder %s145, %s148
      %p157 = scmp.eq.s32.totalorder %s18, 5
      %p158 = por %p156, %p157
      %p159 = scmp.ne.s32.totalorder %s148, %s149
      %p160 = scmp.eq.s32.totalorder %s18, 0
      %p161 = por %p159, %p160
      %p162 = scmp.ne.s32.totalorder %s148, %s149
      %p163 = scmp.eq.s32.totalorder %s19, 5
      %p164 = por %p162, %p163
      %p166 = scmp.ne.s32.totalorder %s149, %s165
      %p167 = scmp.eq.s32.totalorder %s19, 0
      %p168 = por %p166, %p167
      %p169 = scmp.le.s32.totalorder 1, %s13
      %p170 = scmp.lt.s32.totalorder %s13, 7
      %p171 = pnand %p169, %p170
      %p172 = pneg %p171
      // Predicated region
      $region9: #{tpu_custom_call.1} parent=5 // pred_check
        _
      $region10: #{tpu_custom_call.1} parent=5 // pred_check_branch
        %174 = sbr.rel (%p171) target = $region12
      $region11: #{tpu_custom_call.1} parent=5 // pred_region
        %s175 = ssub.s32 %s13, 1
        // Predicated region
        $region13: #{tpu_custom_call.1} parent=11 // pred_check
          %p176 = pneg %p107
        $region14: #{tpu_custom_call.1} parent=11 // pred_check_branch
          %178 = sbr.rel (%p176) target = $region16
        $region15: #{tpu_custom_call.1} parent=11 // pred_region
          %s179 = smul.u32 4, %s22
          %p180 = scmp.lt.s32.totalorder %s179, 3
          %s181 = scalar_select %p180, %s179, 3
          %s182 = smul.addr %s181, 4
          %s183 = scalar_lea.vmem %s2, %s182
          %s184 = smul.u32 4, %s22
        $region16: #{tpu_custom_call.1} parent=11 // pred_fallthru
          _
        // Predicated region
        $region17: #{tpu_custom_call.1} parent=11 // pred_check
          %p185 = pneg %p133
        $region18: #{tpu_custom_call.1} parent=11 // pred_check_branch
          %187 = sbr.rel (%p185) target = $region20
        $region19: #{tpu_custom_call.1} parent=11 // pred_region
          %s188 = smul.u32 4, %s22
          %p189 = scmp.lt.s32.totalorder %s188, 3
          %s190 = scalar_select %p189, %s188, 3
          %s191 = smul.addr %s190, 8
          %s192 = scalar_lea.vmem %s3, %s191
          %s193 = smul.u32 4, %s22
        $region20: #{tpu_custom_call.1} parent=11 // pred_fallthru
          _
      $region12: #{tpu_custom_call.1} parent=5 // pred_fallthru
        _
      %p194 = scmp.lt.s32.totalorder %s13, 6
      // Predicated region
      $region21: #{tpu_custom_call.1} parent=5 // pred_check
        %p195 = pneg %p194
      $region22: #{tpu_custom_call.1} parent=5 // pred_check_branch
        %197 = sbr.rel (%p195) target = $region24
      $region23: #{tpu_custom_call.1} parent=5 // pred_region
        // Predicated region
        $region25: #{tpu_custom_call.1} parent=23 // pred_check
          %p198 = pneg %p45
        $region26: #{tpu_custom_call.1} parent=23 // pred_check_branch
          %200 = sbr.rel (%p198) target = $region28
        $region27: #{tpu_custom_call.1} parent=23 // pred_region
          %s201 = sand.u32 %s35, 1
          %s202 = sand.u32 %s35, 1
          %s203 = smul.addr %s202, 12
          %s204 = scalar_lea.vmem [#allocation2], %s203
          %s205 = smul.u32 4, %s21
          %s206 = ssub.s32 25, %s205
          %p207 = scmp.lt.s32.totalorder %s206, 4
          %s208 = scalar_select %p207, %s206, 4
          %s209 = smul.u32 3, %s208
          %p210 = scmp.ne.s32.totalorder 0, %s209
          %s211 = scalar_lea.vmem %s0, %s205
          // Predicated region
          $region29: #{tpu_custom_call.1} parent=27 // pred_check
            %p212 = pneg %p210
          $region30: #{tpu_custom_call.1} parent=27 // pred_check_branch
            %214 = sbr.rel (%p212) target = $region32
          $region31: #{tpu_custom_call.1} parent=27 // pred_region
            %p215 = scmp.lt.u32.totalorder %s208, 8
            %p216 = pneg %p215
            // Predicated region
            $region33: #{tpu_custom_call.1} parent=31 // pred_check
              _
            $region34: #{tpu_custom_call.1} parent=31 // pred_check_branch
              %218 = sbr.rel (%p215) target = $region36
            $region35: #{tpu_custom_call.1} parent=31 // pred_region
              %s238 = sand.u32 %s208, 7
              %p239 = scmp.eq.s32.totalorder %s238, 0
              // Predicated region
              $region48: #{tpu_custom_call.1} parent=35 // pred_check
                %p240 = pneg %p239
              $region49: #{tpu_custom_call.1} parent=35 // pred_check_branch
                %242 = sbr.rel (%p240) target = $region51
              $region50: #{tpu_custom_call.1} parent=35 // pred_region
                %s243 = sshrl.u32 %s208, 3
                %s244 = sdiv.u32.pop %s243, 12
                %s245 = srem.u32.pop %s243, 12
                // While loop
                $region52: #{tpu_custom_call.1} parent=50 // loop_pre_header
                  _
                $region53: #{tpu_custom_call.1} parent=50 // loop_header
                  %s247 = sphi 0, %s249
                  %p248 = scmp.ge.s32.totalorder %s247, %s244
                  %s252 = sphi 0, %s329
                  %s253 = sphi %s211, %s332
                  %s254 = sphi %s204, %s333
                $region54: #{tpu_custom_call.1} parent=50 // loop_header_branch
                  %251 = sbr.rel (%p248) target = $region58
                $region55: #{tpu_custom_call.1} parent=50 // loop_body
                  %v255 = vld [vmem:[%s253] sm:$0xff]
                  %256 = vst [vmem:[%s254] sm:$0xff] %v255
                  %v257 = vld [vmem:[%s253 + $0x8] sm:$0xff]
                  %258 = vst [vmem:[%s254 + $0x8] sm:$0xff] %v257
                  %v259 = vld [vmem:[%s253 + $0x10] sm:$0xff]
                  %260 = vst [vmem:[%s254 + $0x10] sm:$0xff] %v259
                  %v261 = vld [vmem:[%s253 + $0x18] sm:$0xff]
                  %262 = vst [vmem:[%s254 + $0x18] sm:$0xff] %v261
                  %v263 = vld [vmem:[%s253 + $0x20] sm:$0xff]
                  %264 = vst [vmem:[%s254 + $0x20] sm:$0xff] %v263
                  %v265 = vld [vmem:[%s253 + $0x28] sm:$0xff]
                  %266 = vst [vmem:[%s254 + $0x28] sm:$0xff] %v265
                  %v267 = vld [vmem:[%s253 + $0x30] sm:$0xff]
                  %268 = vst [vmem:[%s254 + $0x30] sm:$0xff] %v267
                  %v269 = vld [vmem:[%s253 + $0x38] sm:$0xff]
                  %270 = vst [vmem:[%s254 + $0x38] sm:$0xff] %v269
                  %v271 = vld [vmem:[%s253 + $0x40] sm:$0xff]
                  %272 = vst [vmem:[%s254 + $0x40] sm:$0xff] %v271
                  %v273 = vld [vmem:[%s253 + $0x48] sm:$0xff]
                  %274 = vst [vmem:[%s254 + $0x48] sm:$0xff] %v273
                  %v275 = vld [vmem:[%s253 + $0x50] sm:$0xff]
                  %276 = vst [vmem:[%s254 + $0x50] sm:$0xff] %v275
                  %v277 = vld [vmem:[%s253 + $0x58] sm:$0xff]
                  %278 = vst [vmem:[%s254 + $0x58] sm:$0xff] %v277
                  %v279 = vld [vmem:[%s253 + $0x19] sm:$0xff]
                  %280 = vst [vmem:[%s254 + $0x4] sm:$0xff] %v279
                  %v281 = vld [vmem:[%s253 + $0x21] sm:$0xff]
                  %282 = vst [vmem:[%s254 + $0xc] sm:$0xff] %v281
                  %v283 = vld [vmem:[%s253 + $0x29] sm:$0xff]
                  %284 = vst [vmem:[%s254 + $0x14] sm:$0xff] %v283
                  %v285 = vld [vmem:[%s253 + $0x31] sm:$0xff]
                  %286 = vst [vmem:[%s254 + $0x1c] sm:$0xff] %v285
                  %v287 = vld [vmem:[%s253 + $0x39] sm:$0xff]
                  %288 = vst [vmem:[%s254 + $0x24] sm:$0xff] %v287
                  %v289 = vld [vmem:[%s253 + $0x41] sm:$0xff]
                  %290 = vst [vmem:[%s254 + $0x2c] sm:$0xff] %v289
                  %v291 = vld [vmem:[%s253 + $0x49] sm:$0xff]
                  %292 = vst [vmem:[%s254 + $0x34] sm:$0xff] %v291
                  %v293 = vld [vmem:[%s253 + $0x51] sm:$0xff]
                  %294 = vst [vmem:[%s254 + $0x3c] sm:$0xff] %v293
                  %v295 = vld [vmem:[%s253 + $0x59] sm:$0xff]
                  %296 = vst [vmem:[%s254 + $0x44] sm:$0xff] %v295
                  %v297 = vld [vmem:[%s253 + $0x61] sm:$0xff]
                  %298 = vst [vmem:[%s254 + $0x4c] sm:$0xff] %v297
                  %v299 = vld [vmem:[%s253 + $0x69] sm:$0xff]
                  %300 = vst [vmem:[%s254 + $0x54] sm:$0xff] %v299
                  %v301 = vld [vmem:[%s253 + $0x71] sm:$0xff]
                  %302 = vst [vmem:[%s254 + $0x5c] sm:$0xff] %v301
                  %v303 = vld [vmem:[%s253 + $0x32] sm:$0xff]
                  %304 = vst [vmem:[%s254 + $0x8] sm:$0xff] %v303
                  %v305 = vld [vmem:[%s253 + $0x3a] sm:$0xff]
                  %306 = vst [vmem:[%s254 + $0x10] sm:$0xff] %v305
                  %v307 = vld [vmem:[%s253 + $0x42] sm:$0xff]
                  %308 = vst [vmem:[%s254 + $0x18] sm:$0xff] %v307
                  %v309 = vld [vmem:[%s253 + $0x4a] sm:$0xff]
                  %310 = vst [vmem:[%s254 + $0x20] sm:$0xff] %v309
                  %v311 = vld [vmem:[%s253 + $0x52] sm:$0xff]
                  %312 = vst [vmem:[%s254 + $0x28] sm:$0xff] %v311
                  %v313 = vld [vmem:[%s253 + $0x5a] sm:$0xff]
                  %314 = vst [vmem:[%s254 + $0x30] sm:$0xff] %v313
                  %v315 = vld [vmem:[%s253 + $0x62] sm:$0xff]
                  %316 = vst [vmem:[%s254 + $0x38] sm:$0xff] %v315
                  %v317 = vld [vmem:[%s253 + $0x6a] sm:$0xff]
                  %318 = vst [vmem:[%s254 + $0x40] sm:$0xff] %v317
                  %v319 = vld [vmem:[%s253 + $0x72] sm:$0xff]
                  %320 = vst [vmem:[%s254 + $0x48] sm:$0xff] %v319
                  %v321 = vld [vmem:[%s253 + $0x7a] sm:$0xff]
                  %322 = vst [vmem:[%s254 + $0x50] sm:$0xff] %v321
                  %v323 = vld [vmem:[%s253 + $0x82] sm:$0xff]
                  %324 = vst [vmem:[%s254 + $0x58] sm:$0xff] %v323
                  %v325 = vld [vmem:[%s253 + $0x8a] sm:$0xff]
                  %326 = vst [vmem:[%s254 + $0x60] sm:$0xff] %v325
                  %s327 = sadd.s32 1, %s252
                  %p328 = scmp.ge.s32.totalorder %s327, %s244
                  %s329 = scalar_select %p328, 0, %s327
                  %s330 = smul.u32 %s329, 96
                  %s331 = smul.u32 %s329, 96
                  %s332 = scalar_lea.vmem %s211, %s330
                  %s333 = scalar_lea.vmem %s204, %s331 [#allocation2]
                $region56: #{tpu_custom_call.1} parent=50 // loop_footer
                  %s249 = sadd.s32 %s247, 1
                $region57: #{tpu_custom_call.1} parent=50 // loop_footer_branch
                  %246 = sbr.rel target = $region53
                $region58: #{tpu_custom_call.1} parent=50 // loop_exit
                  _
                %s334 = sdiv.u32.pop %s243, 12
                %s335 = srem.u32.pop %s243, 12
                %s336 = smul.u32 %s334, 12
                %s337 = smul.u32 8, %s336
                %s338 = scalar_lea.vmem %s211, %s337
                %s339 = smul.u32 8, %s336
                %s340 = scalar_lea.vmem %s204, %s339 [#allocation2]
                // While loop
                $region59: #{tpu_custom_call.1} parent=50 // loop_pre_header
                  _
                $region60: #{tpu_custom_call.1} parent=50 // loop_header
                  %s342 = sphi 0, %s344
                  %p343 = scmp.ge.s32.totalorder %s342, %s335
                  %s347 = sphi 0, %s358
                  %s348 = sphi %s338, %s361
                  %s349 = sphi %s340, %s362
                $region61: #{tpu_custom_call.1} parent=50 // loop_header_branch
                  %346 = sbr.rel (%p343) target = $region65
                $region62: #{tpu_custom_call.1} parent=50 // loop_body
                  %v350 = vld [vmem:[%s348] sm:$0xff]
                  %351 = vst [vmem:[%s349] sm:$0xff] %v350
                  %v352 = vld [vmem:[%s348 + $0x19] sm:$0xff]
                  %353 = vst [vmem:[%s349 + $0x4] sm:$0xff] %v352
                  %v354 = vld [vmem:[%s348 + $0x32] sm:$0xff]
                  %355 = vst [vmem:[%s349 + $0x8] sm:$0xff] %v354
                  %s356 = sadd.s32 1, %s347
                  %p357 = scmp.ge.s32.totalorder %s356, %s335
                  %s358 = scalar_select %p357, 0, %s356
                  %s359 = smul.u32 %s358, 8
                  %s360 = smul.u32 %s358, 8
                  %s361 = scalar_lea.vmem %s338, %s359
                  %s362 = scalar_lea.vmem %s340, %s360 [#allocation2]
                $region63: #{tpu_custom_call.1} parent=50 // loop_footer
                  %s344 = sadd.s32 %s342, 1
                $region64: #{tpu_custom_call.1} parent=50 // loop_footer_branch
                  %341 = sbr.rel target = $region60
                $region65: #{tpu_custom_call.1} parent=50 // loop_exit
                  _
              $region51: #{tpu_custom_call.1} parent=35 // pred_fallthru
                _
              %p363 = pneg %p239
              // Predicated region
              $region66: #{tpu_custom_call.1} parent=35 // pred_check
                _
              $region67: #{tpu_custom_call.1} parent=35 // pred_check_branch
                %365 = sbr.rel (%p239) target = $region69
              $region68: #{tpu_custom_call.1} parent=35 // pred_region
                %s366 = sand.u32 %s208, 7
                %s367 = ssub.s32 %s208, %s366
                %s368 = scalar_lea.vmem %s211, %s367
                %s369 = ssub.s32 %s208, %s366
                %s370 = scalar_lea.vmem %s204, %s369 [#allocation2]
                %s371 = sshrl.u32 %s208, 3
                %s372 = sdiv.u32.pop %s371, 12
                %s373 = srem.u32.pop %s371, 12
                // While loop
                $region70: #{tpu_custom_call.1} parent=68 // loop_pre_header
                  _
                $region71: #{tpu_custom_call.1} parent=68 // loop_header
                  %s375 = sphi 0, %s377
                  %p376 = scmp.ge.s32.totalorder %s375, %s372
                  %s380 = sphi 0, %s457
                  %s381 = sphi %s211, %s460
                  %s382 = sphi %s204, %s461
                $region72: #{tpu_custom_call.1} parent=68 // loop_header_branch
                  %379 = sbr.rel (%p376) target = $region76
                $region73: #{tpu_custom_call.1} parent=68 // loop_body
                  %v383 = vld [vmem:[%s381] sm:$0xff]
                  %384 = vst [vmem:[%s382] sm:$0xff] %v383
                  %v385 = vld [vmem:[%s381 + $0x8] sm:$0xff]
                  %386 = vst [vmem:[%s382 + $0x8] sm:$0xff] %v385
                  %v387 = vld [vmem:[%s381 + $0x10] sm:$0xff]
                  %388 = vst [vmem:[%s382 + $0x10] sm:$0xff] %v387
                  %v389 = vld [vmem:[%s381 + $0x18] sm:$0xff]
                  %390 = vst [vmem:[%s382 + $0x18] sm:$0xff] %v389
                  %v391 = vld [vmem:[%s381 + $0x20] sm:$0xff]
                  %392 = vst [vmem:[%s382 + $0x20] sm:$0xff] %v391
                  %v393 = vld [vmem:[%s381 + $0x28] sm:$0xff]
                  %394 = vst [vmem:[%s382 + $0x28] sm:$0xff] %v393
                  %v395 = vld [vmem:[%s381 + $0x30] sm:$0xff]
                  %396 = vst [vmem:[%s382 + $0x30] sm:$0xff] %v395
                  %v397 = vld [vmem:[%s381 + $0x38] sm:$0xff]
                  %398 = vst [vmem:[%s382 + $0x38] sm:$0xff] %v397
                  %v399 = vld [vmem:[%s381 + $0x40] sm:$0xff]
                  %400 = vst [vmem:[%s382 + $0x40] sm:$0xff] %v399
                  %v401 = vld [vmem:[%s381 + $0x48] sm:$0xff]
                  %402 = vst [vmem:[%s382 + $0x48] sm:$0xff] %v401
                  %v403 = vld [vmem:[%s381 + $0x50] sm:$0xff]
                  %404 = vst [vmem:[%s382 + $0x50] sm:$0xff] %v403
                  %v405 = vld [vmem:[%s381 + $0x58] sm:$0xff]
                  %406 = vst [vmem:[%s382 + $0x58] sm:$0xff] %v405
                  %v407 = vld [vmem:[%s381 + $0x19] sm:$0xff]
                  %408 = vst [vmem:[%s382 + $0x4] sm:$0xff] %v407
                  %v409 = vld [vmem:[%s381 + $0x21] sm:$0xff]
                  %410 = vst [vmem:[%s382 + $0xc] sm:$0xff] %v409
                  %v411 = vld [vmem:[%s381 + $0x29] sm:$0xff]
                  %412 = vst [vmem:[%s382 + $0x14] sm:$0xff] %v411
                  %v413 = vld [vmem:[%s381 + $0x31] sm:$0xff]
                  %414 = vst [vmem:[%s382 + $0x1c] sm:$0xff] %v413
                  %v415 = vld [vmem:[%s381 + $0x39] sm:$0xff]
                  %416 = vst [vmem:[%s382 + $0x24] sm:$0xff] %v415
                  %v417 = vld [vmem:[%s381 + $0x41] sm:$0xff]
                  %418 = vst [vmem:[%s382 + $0x2c] sm:$0xff] %v417
                  %v419 = vld [vmem:[%s381 + $0x49] sm:$0xff]
                  %420 = vst [vmem:[%s382 + $0x34] sm:$0xff] %v419
                  %v421 = vld [vmem:[%s381 + $0x51] sm:$0xff]
                  %422 = vst [vmem:[%s382 + $0x3c] sm:$0xff] %v421
                  %v423 = vld [vmem:[%s381 + $0x59] sm:$0xff]
                  %424 = vst [vmem:[%s382 + $0x44] sm:$0xff] %v423
                  %v425 = vld [vmem:[%s381 + $0x61] sm:$0xff]
                  %426 = vst [vmem:[%s382 + $0x4c] sm:$0xff] %v425
                  %v427 = vld [vmem:[%s381 + $0x69] sm:$0xff]
                  %428 = vst [vmem:[%s382 + $0x54] sm:$0xff] %v427
                  %v429 = vld [vmem:[%s381 + $0x71] sm:$0xff]
                  %430 = vst [vmem:[%s382 + $0x5c] sm:$0xff] %v429
                  %v431 = vld [vmem:[%s381 + $0x32] sm:$0xff]
                  %432 = vst [vmem:[%s382 + $0x8] sm:$0xff] %v431
                  %v433 = vld [vmem:[%s381 + $0x3a] sm:$0xff]
                  %434 = vst [vmem:[%s382 + $0x10] sm:$0xff] %v433
                  %v435 = vld [vmem:[%s381 + $0x42] sm:$0xff]
                  %436 = vst [vmem:[%s382 + $0x18] sm:$0xff] %v435
                  %v437 = vld [vmem:[%s381 + $0x4a] sm:$0xff]
                  %438 = vst [vmem:[%s382 + $0x20] sm:$0xff] %v437
                  %v439 = vld [vmem:[%s381 + $0x52] sm:$0xff]
                  %440 = vst [vmem:[%s382 + $0x28] sm:$0xff] %v439
                  %v441 = vld [vmem:[%s381 + $0x5a] sm:$0xff]
                  %442 = vst [vmem:[%s382 + $0x30] sm:$0xff] %v441
                  %v443 = vld [vmem:[%s381 + $0x62] sm:$0xff]
                  %444 = vst [vmem:[%s382 + $0x38] sm:$0xff] %v443
                  %v445 = vld [vmem:[%s381 + $0x6a] sm:$0xff]
                  %446 = vst [vmem:[%s382 + $0x40] sm:$0xff] %v445
                  %v447 = vld [vmem:[%s381 + $0x72] sm:$0xff]
                  %448 = vst [vmem:[%s382 + $0x48] sm:$0xff] %v447
                  %v449 = vld [vmem:[%s381 + $0x7a] sm:$0xff]
                  %450 = vst [vmem:[%s382 + $0x50] sm:$0xff] %v449
                  %v451 = vld [vmem:[%s381 + $0x82] sm:$0xff]
                  %452 = vst [vmem:[%s382 + $0x58] sm:$0xff] %v451
                  %v453 = vld [vmem:[%s381 + $0x8a] sm:$0xff]
                  %454 = vst [vmem:[%s382 + $0x60] sm:$0xff] %v453
                  %s455 = sadd.s32 1, %s380
                  %p456 = scmp.ge.s32.totalorder %s455, %s372
                  %s457 = scalar_select %p456, 0, %s455
                  %s458 = smul.u32 %s457, 96
                  %s459 = smul.u32 %s457, 96
                  %s460 = scalar_lea.vmem %s211, %s458
                  %s461 = scalar_lea.vmem %s204, %s459 [#allocation2]
                $region74: #{tpu_custom_call.1} parent=68 // loop_footer
                  %s377 = sadd.s32 %s375, 1
                $region75: #{tpu_custom_call.1} parent=68 // loop_footer_branch
                  %374 = sbr.rel target = $region71
                $region76: #{tpu_custom_call.1} parent=68 // loop_exit
                  _
                %s462 = sdiv.u32.pop %s371, 12
                %s463 = srem.u32.pop %s371, 12
                %s464 = smul.u32 %s462, 12
                %s465 = smul.u32 8, %s464
                %s466 = scalar_lea.vmem %s211, %s465
                %s467 = smul.u32 8, %s464
                %s468 = scalar_lea.vmem %s204, %s467 [#allocation2]
                // While loop
                $region77: #{tpu_custom_call.1} parent=68 // loop_pre_header
                  _
                $region78: #{tpu_custom_call.1} parent=68 // loop_header
                  %s470 = sphi 0, %s472
                  %p471 = scmp.ge.s32.totalorder %s470, %s463
                  %s475 = sphi 0, %s486
                  %s476 = sphi %s466, %s489
                  %s477 = sphi %s468, %s490
                $region79: #{tpu_custom_call.1} parent=68 // loop_header_branch
                  %474 = sbr.rel (%p471) target = $region83
                $region80: #{tpu_custom_call.1} parent=68 // loop_body
                  %v478 = vld [vmem:[%s476] sm:$0xff]
                  %479 = vst [vmem:[%s477] sm:$0xff] %v478
                  %v480 = vld [vmem:[%s476 + $0x19] sm:$0xff]
                  %481 = vst [vmem:[%s477 + $0x4] sm:$0xff] %v480
                  %v482 = vld [vmem:[%s476 + $0x32] sm:$0xff]
                  %483 = vst [vmem:[%s477 + $0x8] sm:$0xff] %v482
                  %s484 = sadd.s32 1, %s475
                  %p485 = scmp.ge.s32.totalorder %s484, %s463
                  %s486 = scalar_select %p485, 0, %s484
                  %s487 = smul.u32 %s486, 8
                  %s488 = smul.u32 %s486, 8
                  %s489 = scalar_lea.vmem %s466, %s487
                  %s490 = scalar_lea.vmem %s468, %s488 [#allocation2]
                $region81: #{tpu_custom_call.1} parent=68 // loop_footer
                  %s472 = sadd.s32 %s470, 1
                $region82: #{tpu_custom_call.1} parent=68 // loop_footer_branch
                  %469 = sbr.rel target = $region78
                $region83: #{tpu_custom_call.1} parent=68 // loop_exit
                  _
                %s491 = sshll.u32 1, %s366
                %s492 = ssub.s32 %s491, 1
                loop: start=0, step=1, limit=1
                $region84: #{tpu_custom_call.1} parent=68 // loop_pre_header
                  _
                $region85: #{tpu_custom_call.1} parent=68 // loop_header
                  %s494 = sphi 0, %s498
                  %p495 = scmp.ge.s32.totalorder %s494, 1
                  %s499 = sphi %s368, %s368
                  %s500 = sphi %s370, %s370
                $region86: #{tpu_custom_call.1} parent=68 // loop_header_branch
                  %497 = sbr.rel (%p495) target = $region90
                $region87: #{tpu_custom_call.1} parent=68 // loop_body
                  %v501 = vld [vmem:[%s499] sm:%s492]
                  %502 = vst [vmem:[%s500] sm:%s492] %v501
                  %v503 = vld [vmem:[%s499 + $0x19] sm:%s492]
                  %504 = vst [vmem:[%s500 + $0x4] sm:%s492] %v503
                  %v505 = vld [vmem:[%s499 + $0x32] sm:%s492]
                  %506 = vst [vmem:[%s500 + $0x8] sm:%s492] %v505
                $region88: #{tpu_custom_call.1} parent=68 // loop_footer
                  %s498 = sadd.s32 1, %s494
                $region89: #{tpu_custom_call.1} parent=68 // loop_footer_branch
                  %493 = sbr.rel target = $region85
                $region90: #{tpu_custom_call.1} parent=68 // loop_exit
                  _
              $region69: #{tpu_custom_call.1} parent=35 // pred_fallthru
                _
            $region36: #{tpu_custom_call.1} parent=31 // pred_fallthru
              _
            // Predicated region
            $region37: #{tpu_custom_call.1} parent=31 // pred_check
              %p219 = pneg %p215
            $region38: #{tpu_custom_call.1} parent=31 // pred_check_branch
              %221 = sbr.rel (%p219) target = $region40
            $region39: #{tpu_custom_call.1} parent=31 // pred_region
              %s222 = sshll.u32 1, %s208
              %s223 = ssub.s32 %s222, 1
              loop: start=0, step=1, limit=1
              $region41: #{tpu_custom_call.1} parent=39 // loop_pre_header
                _
              $region42: #{tpu_custom_call.1} parent=39 // loop_header
                %s225 = sphi 0, %s229
                %p226 = scmp.ge.s32.totalorder %s225, 1
                %s230 = sphi %s211, %s211
                %s231 = sphi %s204, %s204
              $region43: #{tpu_custom_call.1} parent=39 // loop_header_branch
                %228 = sbr.rel (%p226) target = $region47
              $region44: #{tpu_custom_call.1} parent=39 // loop_body
                %v232 = vld [vmem:[%s230] sm:%s223]
                %233 = vst [vmem:[%s231] sm:%s223] %v232
                %v234 = vld [vmem:[%s230 + $0x19] sm:%s223]
                %235 = vst [vmem:[%s231 + $0x4] sm:%s223] %v234
                %v236 = vld [vmem:[%s230 + $0x32] sm:%s223]
                %237 = vst [vmem:[%s231 + $0x8] sm:%s223] %v236
              $region45: #{tpu_custom_call.1} parent=39 // loop_footer
                %s229 = sadd.s32 1, %s225
              $region46: #{tpu_custom_call.1} parent=39 // loop_footer_branch
                %224 = sbr.rel target = $region42
              $region47: #{tpu_custom_call.1} parent=39 // loop_exit
                _
            $region40: #{tpu_custom_call.1} parent=31 // pred_fallthru
              _
          $region32: #{tpu_custom_call.1} parent=27 // pred_fallthru
            _
          %507 = vnop
        $region28: #{tpu_custom_call.1} parent=23 // pred_fallthru
          _
        // Predicated region
        $region91: #{tpu_custom_call.1} parent=23 // pred_check
          %p508 = pneg %p75
        $region92: #{tpu_custom_call.1} parent=23 // pred_check_branch
          %510 = sbr.rel (%p508) target = $region94
        $region93: #{tpu_custom_call.1} parent=23 // pred_region
          %s511 = sand.u32 %s65, 1
          %s512 = sand.u32 %s65, 1
          %s513 = smul.addr %s512, 3
          %s514 = scalar_lea.vmem [#allocation3], %s513
          %s515 = smul.u32 %s21, 4
          %s516 = sadd.s32 %s515, 4
          %s517 = scalar_lea.vmem %s1, %s516
          // Predicated region
          $region95: #{tpu_custom_call.1} parent=93 // pred_check
            _
          $region96: #{tpu_custom_call.1} parent=93 // pred_check_branch
            %519 = sbr.rel (0) target = $region98
          $region97: #{tpu_custom_call.1} parent=93 // pred_region
            // Predicated region
            $region99: #{tpu_custom_call.1} parent=97 // pred_check
              _
            $region100: #{tpu_custom_call.1} parent=97 // pred_check_branch
              %521 = sbr.rel target = $region102
            $region101: #{tpu_custom_call.1} parent=97 // pred_region
              // Predicated region
              $region114: #{tpu_custom_call.1} parent=101 // pred_check
                _
              $region115: #{tpu_custom_call.1} parent=101 // pred_check_branch
                %541 = sbr.rel (0) target = $region117
              $region116: #{tpu_custom_call.1} parent=101 // pred_region
                %s543 = ssub.s32 2, 1
                loop: start=0, step=1, limit=1
                $region118: #{tpu_custom_call.1} parent=116 // loop_pre_header
                  _
                $region119: #{tpu_custom_call.1} parent=116 // loop_header
                  %s545 = sphi 0, %s549
                  %p546 = scmp.ge.s32.totalorder %s545, 1
                  %s550 = sphi %s517, %s517
                  %s551 = sphi %s514, %s514
                $region120: #{tpu_custom_call.1} parent=116 // loop_header_branch
                  %548 = sbr.rel (%p546) target = $region124
                $region121: #{tpu_custom_call.1} parent=116 // loop_body
                  %v552 = vld [vmem:[%s550] sm:%s543]
                  %553 = vst [vmem:[%s551] sm:%s543] %v552
                  %v554 = vld [vmem:[%s550 + $0x19] sm:%s543]
                  %555 = vst [vmem:[%s551 + $0x1] sm:%s543] %v554
                  %v556 = vld [vmem:[%s550 + $0x32] sm:%s543]
                  %557 = vst [vmem:[%s551 + $0x2] sm:%s543] %v556
                $region122: #{tpu_custom_call.1} parent=116 // loop_footer
                  %s549 = sadd.s32 1, %s545
                $region123: #{tpu_custom_call.1} parent=116 // loop_footer_branch
                  %544 = sbr.rel target = $region119
                $region124: #{tpu_custom_call.1} parent=116 // loop_exit
                  _
              $region117: #{tpu_custom_call.1} parent=101 // pred_fallthru
                _
            $region102: #{tpu_custom_call.1} parent=97 // pred_fallthru
              _
            // Predicated region
            $region103: #{tpu_custom_call.1} parent=97 // pred_check
              _
            $region104: #{tpu_custom_call.1} parent=97 // pred_check_branch
              %523 = sbr.rel (0) target = $region106
            $region105: #{tpu_custom_call.1} parent=97 // pred_region
              %s525 = ssub.s32 2, 1
              loop: start=0, step=1, limit=1
              $region107: #{tpu_custom_call.1} parent=105 // loop_pre_header
                _
              $region108: #{tpu_custom_call.1} parent=105 // loop_header
                %s527 = sphi 0, %s531
                %p528 = scmp.ge.s32.totalorder %s527, 1
                %s532 = sphi %s517, %s517
                %s533 = sphi %s514, %s514
              $region109: #{tpu_custom_call.1} parent=105 // loop_header_branch
                %530 = sbr.rel (%p528) target = $region113
              $region110: #{tpu_custom_call.1} parent=105 // loop_body
                %v534 = vld [vmem:[%s532] sm:%s525]
                %535 = vst [vmem:[%s533] sm:%s525] %v534
                %v536 = vld [vmem:[%s532 + $0x19] sm:%s525]
                %537 = vst [vmem:[%s533 + $0x1] sm:%s525] %v536
                %v538 = vld [vmem:[%s532 + $0x32] sm:%s525]
                %539 = vst [vmem:[%s533 + $0x2] sm:%s525] %v538
              $region111: #{tpu_custom_call.1} parent=105 // loop_footer
                %s531 = sadd.s32 1, %s527
              $region112: #{tpu_custom_call.1} parent=105 // loop_footer_branch
                %526 = sbr.rel target = $region108
              $region113: #{tpu_custom_call.1} parent=105 // loop_exit
                _
            $region106: #{tpu_custom_call.1} parent=97 // pred_fallthru
              _
          $region98: #{tpu_custom_call.1} parent=93 // pred_fallthru
            _
          %558 = vnop
        $region94: #{tpu_custom_call.1} parent=23 // pred_fallthru
          _
      $region24: #{tpu_custom_call.1} parent=5 // pred_fallthru
        _
      %p559 = scmp.le.s32.totalorder 1, %s13
      %p560 = scmp.lt.s32.totalorder %s13, 7
      %p561 = pnand %p559, %p560
      %p562 = pneg %p561
      // Predicated region
      $region125: #{tpu_custom_call.1} parent=5 // pred_check
        _
      $region126: #{tpu_custom_call.1} parent=5 // pred_check_branch
        %564 = sbr.rel (%p561) target = $region128
      $region127: #{tpu_custom_call.1} parent=5 // pred_region
        %s565 = ssub.s32 %s13, 1
        %s566 = sand.u32 %s38, 1
        %s567 = sand.u32 %s38, 1
        %s568 = smul.addr %s567, 12
        %s569 = scalar_lea.vmem [#allocation2], %s568
        // Predicated region
        $region129: #{tpu_custom_call.1} parent=127 // pred_check
          %p570 = pneg %p51
        $region130: #{tpu_custom_call.1} parent=127 // pred_check_branch
          %572 = sbr.rel (%p570) target = $region132
        $region131: #{tpu_custom_call.1} parent=127 // pred_region
          _
        $region132: #{tpu_custom_call.1} parent=127 // pred_fallthru
          _
        %s573 = sand.u32 %s68, 1
        %s574 = sand.u32 %s68, 1
        %s575 = smul.addr %s574, 3
        %s576 = scalar_lea.vmem [#allocation3], %s575
        // Predicated region
        $region133: #{tpu_custom_call.1} parent=127 // pred_check
          %p577 = pneg %p81
        $region134: #{tpu_custom_call.1} parent=127 // pred_check_branch
          %579 = sbr.rel (%p577) target = $region136
        $region135: #{tpu_custom_call.1} parent=127 // pred_region
          _
        $region136: #{tpu_custom_call.1} parent=127 // pred_fallthru
          _
        %s580 = sand.u32 %s38, 1
        %s581 = sand.u32 %s38, 1
        %s582 = smul.addr %s581, 12
        %s583 = scalar_lea.vmem [#allocation2], %s582
        %p584 = pneg %p51
        %p585 = pneg %p48
        %s586 = sand.u32 %s68, 1
        %s587 = sand.u32 %s68, 1
        %s588 = smul.addr %s587, 3
        %s589 = scalar_lea.vmem [#allocation3], %s588
        %p590 = pneg %p81
        %p591 = pneg %p78
        %s592 = smul.u32 4, %s22
        %p593 = scmp.lt.s32.totalorder %s592, 3
        %s594 = scalar_select %p593, %s592, 3
        %s595 = smul.addr %s594, 4
        %s596 = scalar_lea.vmem %s2, %s595
        %p597 = pneg %p107
        %p598 = pneg %p104
        %s599 = smul.u32 4, %s22
        %p600 = scmp.lt.s32.totalorder %s599, 3
        %s601 = scalar_select %p600, %s599, 3
        %s602 = smul.addr %s601, 8
        %s603 = scalar_lea.vmem %s3, %s602
        %p604 = pneg %p133
        %p605 = pneg %p130
        %p606 = pneg %p161
        %p607 = pneg %p158
        %s608 = sand.u32 %s148, 1
        %s609 = scalar_lea.sflag [#allocation5], %s608
        %s610 = sand.u32 %s148, 1
        %s611 = smul.addr %s610, 128
        %s612 = scalar_lea.vmem [#allocation4], %s611
        %s613 = smul.u32 4, %s23
        %s614 = ssub.s32 25, %s613
        %p615 = scmp.lt.s32.totalorder %s614, 4
        %s616 = scalar_select %p615, %s614, 4
        %s617 = smul.u32 3, %s616
        %s618 = smul.u32 %s23, 4
        %s619 = sadd.s32 %s618, 4
        %s620 = smul.u32 4, %s22
        %p621 = scmp.lt.s32.totalorder %s620, 3
        %s622 = scalar_select %p621, %s620, 3
        %s623 = smul.addr %s622, 4
        %s624 = scalar_lea.vmem %s2, %s623
        %s625 = smul.u32 4, %s22
        %s626 = smul.u32 4, %s22
        %p627 = scmp.lt.s32.totalorder %s626, 3
        %s628 = scalar_select %p627, %s626, 3
        %s629 = smul.addr %s628, 8
        %s630 = scalar_lea.vmem %s3, %s629
        %s631 = smul.u32 4, %s22
        %s632 = smul.u32 4, %s22
        %s633 = smul.u32 4, %s23
        %v634 = vld [vmem:[%s624] sm:$0xf]
        %v635 = vld [vmem:[%s624 + $0x4] sm:$0xf]
        %v636 = vld [vmem:[%s624 + $0x8] sm:$0xf]
        %v637 = vld [vmem:[%s624 + $0xc] sm:$0xf]
        %v638 = vunpack.c.l.bf16 %v634
        %v639 = vunpack.c.l.bf16 %v635
        %v640 = vunpack.c.l.bf16 %v636
        %v641 = vunpack.c.l.bf16 %v637
        %v642 = vld [vmem:[%s569] sm:$0xf]
        %v643 = vunpack.c.l.bf16 %v642
        %645 = vset.pattern.permute.xlu0 0
        %646 = vperm.xlu0 %645, %v638
        %v647 = vpop.permute.xlu0 %646
        %650 = vset.pattern.permute.xlu0 0
        %651 = vperm.xlu0 %650, %v639
        %v652 = vpop.permute.xlu0 %651
        %655 = vset.pattern.permute.xlu0 0
        %656 = vperm.xlu0 %655, %v640
        %v657 = vpop.permute.xlu0 %656
        %660 = vset.pattern.permute.xlu0 0
        %661 = vperm.xlu0 %660, %v641
        %v662 = vpop.permute.xlu0 %661
        %v665 = vperm.slane %v643, 0
        %v666 = vperm.slane %v643, 2
        %v667 = vperm.slane %v643, 4
        %v668 = vperm.slane %v643, 6
        %v673 = vperm.slane %v665, 0
        %v674 = vperm.slane %v666, 0
        %v675 = vperm.slane %v667, 0
        %v676 = vperm.slane %v668, 0
        %v677 = vmul.f32 %v647, %v673
        %v678 = vmul.f32 %v647, %v674
        %v679 = vmul.f32 %v647, %v675
        %v680 = vmul.f32 %v647, %v676
        %v681 = vmul.f32 %v652, %v673
        %v682 = vmul.f32 %v652, %v674
        %v683 = vmul.f32 %v652, %v675
        %v684 = vmul.f32 %v652, %v676
        %v685 = vmul.f32 %v657, %v673
        %v686 = vmul.f32 %v657, %v674
        %v687 = vmul.f32 %v657, %v675
        %v688 = vmul.f32 %v657, %v676
        %v689 = vmul.f32 %v662, %v673
        %v690 = vmul.f32 %v662, %v674
        %v691 = vmul.f32 %v662, %v675
        %v692 = vmul.f32 %v662, %v676
        %v693 = vadd.f32 %v677, 0.0
        %v694 = vadd.f32 %v678, 0.0
        %v695 = vadd.f32 %v679, 0.0
        %v696 = vadd.f32 %v680, 0.0
        %v697 = vadd.f32 %v681, 0.0
        %v698 = vadd.f32 %v682, 0.0
        %v699 = vadd.f32 %v683, 0.0
        %v700 = vadd.f32 %v684, 0.0
        %v701 = vadd.f32 %v685, 0.0
        %v702 = vadd.f32 %v686, 0.0
        %v703 = vadd.f32 %v687, 0.0
        %v704 = vadd.f32 %v688, 0.0
        %v705 = vadd.f32 %v689, 0.0
        %v706 = vadd.f32 %v690, 0.0
        %v707 = vadd.f32 %v691, 0.0
        %v708 = vadd.f32 %v692, 0.0
        %s709 = scalar_lea.vmem %s569, 4 [#allocation2]
        %v710 = vld [vmem:[%s709] sm:$0xf]
        %v711 = vunpack.c.l.bf16 %v710
        %712 = vset.pattern.permute.xlu0 1
        %713 = vperm.xlu0 %712, %v638
        %v714 = vpop.permute.xlu0 %713
        %716 = vset.pattern.permute.xlu0 1
        %717 = vperm.xlu0 %716, %v639
        %v718 = vpop.permute.xlu0 %717
        %720 = vset.pattern.permute.xlu0 1
        %721 = vperm.xlu0 %720, %v640
        %v722 = vpop.permute.xlu0 %721
        %724 = vset.pattern.permute.xlu0 1
        %725 = vperm.xlu0 %724, %v641
        %v726 = vpop.permute.xlu0 %725
        %v729 = vperm.slane %v711, 0
        %v730 = vperm.slane %v711, 2
        %v731 = vperm.slane %v711, 4
        %v732 = vperm.slane %v711, 6
        %v737 = vperm.slane %v729, 0
        %v738 = vperm.slane %v730, 0
        %v739 = vperm.slane %v731, 0
        %v740 = vperm.slane %v732, 0
        %v741 = vmul.f32 %v714, %v737
        %v742 = vmul.f32 %v714, %v738
        %v743 = vmul.f32 %v714, %v739
        %v744 = vmul.f32 %v714, %v740
        %v745 = vmul.f32 %v718, %v737
        %v746 = vmul.f32 %v718, %v738
        %v747 = vmul.f32 %v718, %v739
        %v748 = vmul.f32 %v718, %v740
        %v749 = vmul.f32 %v722, %v737
        %v750 = vmul.f32 %v722, %v738
        %v751 = vmul.f32 %v722, %v739
        %v752 = vmul.f32 %v722, %v740
        %v753 = vmul.f32 %v726, %v737
        %v754 = vmul.f32 %v726, %v738
        %v755 = vmul.f32 %v726, %v739
        %v756 = vmul.f32 %v726, %v740
        %v757 = vadd.f32 %v693, %v741
        %v758 = vadd.f32 %v694, %v742
        %v759 = vadd.f32 %v695, %v743
        %v760 = vadd.f32 %v696, %v744
        %v761 = vadd.f32 %v697, %v745
        %v762 = vadd.f32 %v698, %v746
        %v763 = vadd.f32 %v699, %v747
        %v764 = vadd.f32 %v700, %v748
        %v765 = vadd.f32 %v701, %v749
        %v766 = vadd.f32 %v702, %v750
        %v767 = vadd.f32 %v703, %v751
        %v768 = vadd.f32 %v704, %v752
        %v769 = vadd.f32 %v705, %v753
        %v770 = vadd.f32 %v706, %v754
        %v771 = vadd.f32 %v707, %v755
        %v772 = vadd.f32 %v708, %v756
        %s773 = scalar_lea.vmem %s569, 8 [#allocation2]
        %v774 = vld [vmem:[%s773] sm:$0xf]
        %v775 = vunpack.c.l.bf16 %v774
        %776 = vset.pattern.permute.xlu0 2
        %777 = vperm.xlu0 %776, %v638
        %v778 = vpop.permute.xlu0 %777
        %780 = vset.pattern.permute.xlu0 2
        %781 = vperm.xlu0 %780, %v639
        %v782 = vpop.permute.xlu0 %781
        %784 = vset.pattern.permute.xlu0 2
        %785 = vperm.xlu0 %784, %v640
        %v786 = vpop.permute.xlu0 %785
        %788 = vset.pattern.permute.xlu0 2
        %789 = vperm.xlu0 %788, %v641
        %v790 = vpop.permute.xlu0 %789
        %v793 = vperm.slane %v775, 0
        %v794 = vperm.slane %v775, 2
        %v795 = vperm.slane %v775, 4
        %v796 = vperm.slane %v775, 6
        %v801 = vperm.slane %v793, 0
        %v802 = vperm.slane %v794, 0
        %v803 = vperm.slane %v795, 0
        %v804 = vperm.slane %v796, 0
        %v805 = vmul.f32 %v778, %v801
        %v806 = vmul.f32 %v778, %v802
        %v807 = vmul.f32 %v778, %v803
        %v808 = vmul.f32 %v778, %v804
        %v809 = vmul.f32 %v782, %v801
        %v810 = vmul.f32 %v782, %v802
        %v811 = vmul.f32 %v782, %v803
        %v812 = vmul.f32 %v782, %v804
        %v813 = vmul.f32 %v786, %v801
        %v814 = vmul.f32 %v786, %v802
        %v815 = vmul.f32 %v786, %v803
        %v816 = vmul.f32 %v786, %v804
        %v817 = vmul.f32 %v790, %v801
        %v818 = vmul.f32 %v790, %v802
        %v819 = vmul.f32 %v790, %v803
        %v820 = vmul.f32 %v790, %v804
        %v821 = vadd.f32 %v757, %v805
        %v822 = vadd.f32 %v758, %v806
        %v823 = vadd.f32 %v759, %v807
        %v824 = vadd.f32 %v760, %v808
        %v825 = vadd.f32 %v761, %v809
        %v826 = vadd.f32 %v762, %v810
        %v827 = vadd.f32 %v763, %v811
        %v828 = vadd.f32 %v764, %v812
        %v829 = vadd.f32 %v765, %v813
        %v830 = vadd.f32 %v766, %v814
        %v831 = vadd.f32 %v767, %v815
        %v832 = vadd.f32 %v768, %v816
        %v833 = vadd.f32 %v769, %v817
        %v834 = vadd.f32 %v770, %v818
        %v835 = vadd.f32 %v771, %v819
        %v836 = vadd.f32 %v772, %v820
        %v837 = vld [vmem:[%s576] sm:$0x1]
        %839 = vst [vmem:[#allocation1] ss:$9 sm:$0xff] %v642
        %v840 = vld [vmem:[#allocation1] sm:$0xff]
        %v842 = vld [vmem:[#allocation1 + $0x9] sm:$0xff]
        %v844 = vld [vmem:[#allocation1 + $0x12] sm:$0xff]
        %v846 = vld [vmem:[#allocation1 + $0x1b] sm:$0xff]
        %848 = vrot.lane.b32.xlu0 %v840, 127
        %v849 = vpop.permute.xlu0 %848
        %850 = vrot.lane.b32.xlu0 %v842, 127
        %v851 = vpop.permute.xlu0 %850
        %852 = vrot.lane.b32.xlu0 %v844, 127
        %v853 = vpop.permute.xlu0 %852
        %854 = vrot.lane.b32.xlu0 %v846, 127
        %v855 = vpop.permute.xlu0 %854
        %vm856 = vcmask 1039360
        %v857 = vsel %vm856, %v849, %v851
        %v858 = vsel %vm856, %v851, %v853
        %v859 = vsel %vm856, %v853, %v855
        %864 = vst [vmem:[#allocation1] ss:$9 sm:$0xff] %v837
        %v865 = vld [vmem:[#allocation1] sm:$0xff]
        %867 = vrot.lane.b32.xlu0 %v865, 127
        %v868 = vpop.permute.xlu0 %867
        %vm869 = vcmask 1039360
        %v872 = vsel %vm869, %v855, %v868
        %v874 = vunpack.c.l.bf16 %v857
        %v875 = vunpack.c.l.bf16 %v858
        %v876 = vunpack.c.l.bf16 %v859
        %v877 = vunpack.c.l.bf16 %v872
        %878 = vset.pattern.permute.xlu0 3
        %879 = vperm.xlu0 %878, %v638
        %v880 = vpop.permute.xlu0 %879
        %882 = vset.pattern.permute.xlu0 3
        %883 = vperm.xlu0 %882, %v639
        %v884 = vpop.permute.xlu0 %883
        %886 = vset.pattern.permute.xlu0 3
        %887 = vperm.xlu0 %886, %v640
        %v888 = vpop.permute.xlu0 %887
        %890 = vset.pattern.permute.xlu0 3
        %891 = vperm.xlu0 %890, %v641
        %v892 = vpop.permute.xlu0 %891
        %v894 = vperm.slane %v874, 0
        %v895 = vperm.slane %v875, 0
        %v896 = vperm.slane %v876, 0
        %v897 = vperm.slane %v877, 0
        %v898 = vmul.f32 %v880, %v894
        %v899 = vmul.f32 %v880, %v895
        %v900 = vmul.f32 %v880, %v896
        %v901 = vmul.f32 %v880, %v897
        %v902 = vmul.f32 %v884, %v894
        %v903 = vmul.f32 %v884, %v895
        %v904 = vmul.f32 %v884, %v896
        %v905 = vmul.f32 %v884, %v897
        %v906 = vmul.f32 %v888, %v894
        %v907 = vmul.f32 %v888, %v895
        %v908 = vmul.f32 %v888, %v896
        %v909 = vmul.f32 %v888, %v897
        %v910 = vmul.f32 %v892, %v894
        %v911 = vmul.f32 %v892, %v895
        %v912 = vmul.f32 %v892, %v896
        %v913 = vmul.f32 %v892, %v897
        %v914 = vadd.f32 %v821, %v898
        %v915 = vadd.f32 %v822, %v899
        %v916 = vadd.f32 %v823, %v900
        %v917 = vadd.f32 %v824, %v901
        %v918 = vadd.f32 %v825, %v902
        %v919 = vadd.f32 %v826, %v903
        %v920 = vadd.f32 %v827, %v904
        %v921 = vadd.f32 %v828, %v905
        %v922 = vadd.f32 %v829, %v906
        %v923 = vadd.f32 %v830, %v907
        %v924 = vadd.f32 %v831, %v908
        %v925 = vadd.f32 %v832, %v909
        %v926 = vadd.f32 %v833, %v910
        %v927 = vadd.f32 %v834, %v911
        %v928 = vadd.f32 %v835, %v912
        %v929 = vadd.f32 %v836, %v913
        %v930 = vld [vmem:[%s624] sm:$0xf]
        %v931 = vld [vmem:[%s624 + $0x4] sm:$0xf]
        %v932 = vld [vmem:[%s624 + $0x8] sm:$0xf]
        %v933 = vld [vmem:[%s624 + $0xc] sm:$0xf]
        %v934 = vunpack.c.l.bf16 %v930
        %v935 = vunpack.c.l.bf16 %v931
        %v936 = vunpack.c.l.bf16 %v932
        %v937 = vunpack.c.l.bf16 %v933
        %s938 = scalar_lea.vmem %s576, 1 [#allocation3]
        %v939 = vld [vmem:[%s938] sm:$0x1]
        %941 = vst [vmem:[#allocation1] ss:$9 sm:$0xff] %v710
        %v942 = vld [vmem:[#allocation1] sm:$0xff]
        %v944 = vld [vmem:[#allocation1 + $0x9] sm:$0xff]
        %v946 = vld [vmem:[#allocation1 + $0x12] sm:$0xff]
        %v948 = vld [vmem:[#allocation1 + $0x1b] sm:$0xff]
        %950 = vrot.lane.b32.xlu0 %v942, 127
        %v951 = vpop.permute.xlu0 %950
        %952 = vrot.lane.b32.xlu0 %v944, 127
        %v953 = vpop.permute.xlu0 %952
        %954 = vrot.lane.b32.xlu0 %v946, 127
        %v955 = vpop.permute.xlu0 %954
        %956 = vrot.lane.b32.xlu0 %v948, 127
        %v957 = vpop.permute.xlu0 %956
        %v958 = vsel %vm856, %v951, %v953
        %v959 = vsel %vm856, %v953, %v955
        %v960 = vsel %vm856, %v955, %v957
        %965 = vst [vmem:[#allocation1] ss:$9 sm:$0xff] %v939
        %v966 = vld [vmem:[#allocation1] sm:$0xff]
        %968 = vrot.lane.b32.xlu0 %v966, 127
        %v969 = vpop.permute.xlu0 %968
        %v972 = vsel %vm869, %v957, %v969
        %v974 = vunpack.c.l.bf16 %v958
        %v975 = vunpack.c.l.bf16 %v959
        %v976 = vunpack.c.l.bf16 %v960
        %v977 = vunpack.c.l.bf16 %v972
        %979 = vset.pattern.permute.xlu0 4
        %980 = vperm.xlu0 %979, %v934
        %v981 = vpop.permute.xlu0 %980
        %984 = vset.pattern.permute.xlu0 4
        %985 = vperm.xlu0 %984, %v935
        %v986 = vpop.permute.xlu0 %985
        %989 = vset.pattern.permute.xlu0 4
        %990 = vperm.xlu0 %989, %v936
        %v991 = vpop.permute.xlu0 %990
        %994 = vset.pattern.permute.xlu0 4
        %995 = vperm.xlu0 %994, %v937
        %v996 = vpop.permute.xlu0 %995
        %v998 = vperm.slane %v974, 0
        %v999 = vperm.slane %v975, 0
        %v1000 = vperm.slane %v976, 0
        %v1001 = vperm.slane %v977, 0
        %v1002 = vmul.f32 %v981, %v998
        %v1003 = vmul.f32 %v981, %v999
        %v1004 = vmul.f32 %v981, %v1000
        %v1005 = vmul.f32 %v981, %v1001
        %v1006 = vmul.f32 %v986, %v998
        %v1007 = vmul.f32 %v986, %v999
        %v1008 = vmul.f32 %v986, %v1000
        %v1009 = vmul.f32 %v986, %v1001
        %v1010 = vmul.f32 %v991, %v998
        %v1011 = vmul.f32 %v991, %v999
        %v1012 = vmul.f32 %v991, %v1000
        %v1013 = vmul.f32 %v991, %v1001
        %v1014 = vmul.f32 %v996, %v998
        %v1015 = vmul.f32 %v996, %v999
        %v1016 = vmul.f32 %v996, %v1000
        %v1017 = vmul.f32 %v996, %v1001
        %v1018 = vadd.f32 %v914, %v1002
        %v1019 = vadd.f32 %v915, %v1003
        %v1020 = vadd.f32 %v916, %v1004
        %v1021 = vadd.f32 %v917, %v1005
        %v1022 = vadd.f32 %v918, %v1006
        %v1023 = vadd.f32 %v919, %v1007
        %v1024 = vadd.f32 %v920, %v1008
        %v1025 = vadd.f32 %v921, %v1009
        %v1026 = vadd.f32 %v922, %v1010
        %v1027 = vadd.f32 %v923, %v1011
        %v1028 = vadd.f32 %v924, %v1012
        %v1029 = vadd.f32 %v925, %v1013
        %v1030 = vadd.f32 %v926, %v1014
        %v1031 = vadd.f32 %v927, %v1015
        %v1032 = vadd.f32 %v928, %v1016
        %v1033 = vadd.f32 %v929, %v1017
        %v1034 = vld [vmem:[%s630] sm:$0xff]
        %v1035 = vld [vmem:[%s630 + $0x8] sm:$0xff]
        %v1036 = vld [vmem:[%s630 + $0x10] sm:$0xff]
        %v1037 = vld [vmem:[%s630 + $0x18] sm:$0xff]
        %1039 = vset.pattern.permute.xlu0 0
        %1040 = vperm.xlu0 %1039, %v1034
        %v1041 = vpop.permute.xlu0 %1040
        %1044 = vset.pattern.permute.xlu0 0
        %1045 = vperm.xlu0 %1044, %v1035
        %v1046 = vpop.permute.xlu0 %1045
        %1049 = vset.pattern.permute.xlu0 0
        %1050 = vperm.xlu0 %1049, %v1036
        %v1051 = vpop.permute.xlu0 %1050
        %1054 = vset.pattern.permute.xlu0 0
        %1055 = vperm.xlu0 %1054, %v1037
        %v1056 = vpop.permute.xlu0 %1055
        %v1058 = vadd.f32 %v1018, %v1041
        %v1059 = vadd.f32 %v1019, %v1041
        %v1060 = vadd.f32 %v1020, %v1041
        %v1061 = vadd.f32 %v1021, %v1041
        %v1062 = vadd.f32 %v1022, %v1046
        %v1063 = vadd.f32 %v1023, %v1046
        %v1064 = vadd.f32 %v1024, %v1046
        %v1065 = vadd.f32 %v1025, %v1046
        %v1066 = vadd.f32 %v1026, %v1051
        %v1067 = vadd.f32 %v1027, %v1051
        %v1068 = vadd.f32 %v1028, %v1051
        %v1069 = vadd.f32 %v1029, %v1051
        %v1070 = vadd.f32 %v1030, %v1056
        %v1071 = vadd.f32 %v1031, %v1056
        %v1072 = vadd.f32 %v1032, %v1056
        %v1073 = vadd.f32 %v1033, %v1056
        %vm1074 = vcmp.gt.f32.partialorder %v1058, 0.0
        %vm1075 = vcmp.gt.f32.partialorder %v1059, 0.0
        %vm1076 = vcmp.gt.f32.partialorder %v1060, 0.0
        %vm1077 = vcmp.gt.f32.partialorder %v1061, 0.0
        %vm1078 = vcmp.gt.f32.partialorder %v1062, 0.0
        %vm1079 = vcmp.gt.f32.partialorder %v1063, 0.0
        %vm1080 = vcmp.gt.f32.partialorder %v1064, 0.0
        %vm1081 = vcmp.gt.f32.partialorder %v1065, 0.0
        %vm1082 = vcmp.gt.f32.partialorder %v1066, 0.0
        %vm1083 = vcmp.gt.f32.partialorder %v1067, 0.0
        %vm1084 = vcmp.gt.f32.partialorder %v1068, 0.0
        %vm1085 = vcmp.gt.f32.partialorder %v1069, 0.0
        %vm1086 = vcmp.gt.f32.partialorder %v1070, 0.0
        %vm1087 = vcmp.gt.f32.partialorder %v1071, 0.0
        %vm1088 = vcmp.gt.f32.partialorder %v1072, 0.0
        %vm1089 = vcmp.gt.f32.partialorder %v1073, 0.0
        %v1090 = vmul.f32 %v1058, 0.1
        %v1091 = vmul.f32 %v1059, 0.1
        %v1092 = vmul.f32 %v1060, 0.1
        %v1093 = vmul.f32 %v1061, 0.1
        %v1094 = vmul.f32 %v1062, 0.1
        %v1095 = vmul.f32 %v1063, 0.1
        %v1096 = vmul.f32 %v1064, 0.1
        %v1097 = vmul.f32 %v1065, 0.1
        %v1098 = vmul.f32 %v1066, 0.1
        %v1099 = vmul.f32 %v1067, 0.1
        %v1100 = vmul.f32 %v1068, 0.1
        %v1101 = vmul.f32 %v1069, 0.1
        %v1102 = vmul.f32 %v1070, 0.1
        %v1103 = vmul.f32 %v1071, 0.1
        %v1104 = vmul.f32 %v1072, 0.1
        %v1105 = vmul.f32 %v1073, 0.1
        %v1106 = vsel %vm1074, %v1058, %v1090
        %v1107 = vsel %vm1075, %v1059, %v1091
        %v1108 = vsel %vm1076, %v1060, %v1092
        %v1109 = vsel %vm1077, %v1061, %v1093
        %v1110 = vsel %vm1078, %v1062, %v1094
        %v1111 = vsel %vm1079, %v1063, %v1095
        %v1112 = vsel %vm1080, %v1064, %v1096
        %v1113 = vsel %vm1081, %v1065, %v1097
        %v1114 = vsel %vm1082, %v1066, %v1098
        %v1115 = vsel %vm1083, %v1067, %v1099
        %v1116 = vsel %vm1084, %v1068, %v1100
        %v1117 = vsel %vm1085, %v1069, %v1101
        %v1118 = vsel %vm1086, %v1070, %v1102
        %v1119 = vsel %vm1087, %v1071, %v1103
        %v1120 = vsel %vm1088, %v1072, %v1104
        %v1121 = vsel %vm1089, %v1073, %v1105
        %1122 = vst [vmem:[%s612] sm:$0xff] %v1106
        %1123 = vst [vmem:[%s612 + $0x8] sm:$0xff] %v1107
        %1124 = vst [vmem:[%s612 + $0x10] sm:$0xff] %v1108
        %1125 = vst [vmem:[%s612 + $0x18] sm:$0xff] %v1109
        %1126 = vst [vmem:[%s612 + $0x20] sm:$0xff] %v1110
        %1127 = vst [vmem:[%s612 + $0x28] sm:$0xff] %v1111
        %1128 = vst [vmem:[%s612 + $0x30] sm:$0xff] %v1112
        %1129 = vst [vmem:[%s612 + $0x38] sm:$0xff] %v1113
        %1130 = vst [vmem:[%s612 + $0x40] sm:$0xff] %v1114
        %1131 = vst [vmem:[%s612 + $0x48] sm:$0xff] %v1115
        %1132 = vst [vmem:[%s612 + $0x50] sm:$0xff] %v1116
        %1133 = vst [vmem:[%s612 + $0x58] sm:$0xff] %v1117
        %1134 = vst [vmem:[%s612 + $0x60] sm:$0xff] %v1118
        %1135 = vst [vmem:[%s612 + $0x68] sm:$0xff] %v1119
        %1136 = vst [vmem:[%s612 + $0x70] sm:$0xff] %v1120
        %1137 = vst [vmem:[%s612 + $0x78] sm:$0xff] %v1121
        %s1138 = sand.u32 %s148, 1
        %s1139 = scalar_lea.sflag [#allocation5], %s1138
        %s1140 = sand.u32 %s148, 1
        %s1141 = smul.addr %s1140, 128
        %s1142 = scalar_lea.vmem [#allocation4], %s1141
        // Predicated region
        $region137: #{tpu_custom_call.1} parent=127 // pred_check
          %p1143 = pneg %p158
        $region138: #{tpu_custom_call.1} parent=127 // pred_check_branch
          %1145 = sbr.rel (%p1143) target = $region140
        $region139: #{tpu_custom_call.1} parent=127 // pred_region
          %s1146 = smul.u32 4, %s22
          %s1147 = smul.u32 4, %s23
          %1149 = vsyncadd %s1139, 0
          %s1150 = smul.addr %s1146, 24
          %s1151 = sadd.s32 %s1147, %s1150
          %s1152 = smul.addr %s1151, 8
          %s1153 = scalar_lea.hbm %s4, %s1152
          %s1154 = sshll.u32 %s1142, 4
          %s1155 = int_to_ptr.vmem [resolvable:$true] %s1154
          %s1156 = sshll.u32 %s1153, 4
          %s1157 = int_to_ptr.hbm [resolvable:$true] %s1156
          %1162 = dma.vmem_to_hbm [thread:$0]  %s1155, 2048, %s1157, %s1139, 512, 3072, 32
        $region140: #{tpu_custom_call.1} parent=127 // pred_fallthru
          _
      $region128: #{tpu_custom_call.1} parent=5 // pred_fallthru
        _
      %p1163 = scmp.le.s32.totalorder 2, %s13
      // Predicated region
      $region141: #{tpu_custom_call.1} parent=5 // pred_check
        %p1164 = pneg %p1163
      $region142: #{tpu_custom_call.1} parent=5 // pred_check_branch
        %1166 = sbr.rel (%p1164) target = $region144
      $region143: #{tpu_custom_call.1} parent=5 // pred_region
        %s1167 = ssub.s32 %s13, 2
        // Predicated region
        $region145: #{tpu_custom_call.1} parent=143 // pred_check
          %p1168 = pneg %p164
        $region146: #{tpu_custom_call.1} parent=143 // pred_check_branch
          %1170 = sbr.rel (%p1168) target = $region148
        $region147: #{tpu_custom_call.1} parent=143 // pred_region
          %s1171 = sand.u32 %s149, 1
          %s1172 = scalar_lea.sflag [#allocation5], %s1171
          %s1173 = sand.u32 %s149, 1
          %s1174 = smul.addr %s1173, 128
          %s1175 = scalar_lea.vmem [#allocation4], %s1174
          %1177 = dma.done %s1172, 2048
        $region148: #{tpu_custom_call.1} parent=143 // pred_fallthru
          _
      $region144: #{tpu_custom_call.1} parent=5 // pred_fallthru
        _
    $region6: #{tpu_custom_call.1} parent=1 // loop_footer
      %s17 = sadd.s32 1, %s13
    $region7: #{tpu_custom_call.1} parent=1 // loop_footer_branch
      %12 = sbr.rel target = $region3
    $region8: #{tpu_custom_call.1} parent=1 // loop_exit
      _
    %1178 = vsyncpa [#allocation5], 1
    %s1179 = scalar_lea.sflag [#allocation5], 1
    %1180 = vsyncpa %s1179, 1

</llo_original>
